<compile_context>
chip_gen: v6e
topology: v6e:2x2x1
jax: 0.10.0
libtpu: 0.0.40
codegen_flags: <defaults>
</compile_context>

<pallas_src>
import jax
import jax.numpy as jnp
from jax.experimental import pallas as pl
from jax.experimental.pallas import tpu as pltpu

SMOOTH = 1e-5
DICE_EPS = 1e-7
ALPHA = 0.1
GAMMA = 4.5
FOCAL_NORM_EPS = 1e-6

LANE = 128
MAX_TILE_ROWS = 256          # 256*128 = 32768 pixels/class/tile -> 512 KiB f32 block


def _make_kernel(C, P_total):
    """Kernel over blocks x:(C, T, 128) f32, y:(T, 128) i32, scalar SMEM output."""

    def kernel(x_ref, y_ref, o_ref,
               inter_acc, sump_acc, cnt_acc, ft_acc, wfl_acc):
        n = pl.program_id(0)
        t = pl.program_id(1)
        is_first = jnp.logical_and(n == 0, t == 0)
        is_last = jnp.logical_and(n == pl.num_programs(0) - 1,
                                  t == pl.num_programs(1) - 1)

        @pl.when(is_first)
        def _init():
            inter_acc[...] = jnp.zeros_like(inter_acc)
            sump_acc[...] = jnp.zeros_like(sump_acc)
            cnt_acc[...] = jnp.zeros_like(cnt_acc)
            ft_acc[...] = jnp.zeros_like(ft_acc)
            wfl_acc[...] = jnp.zeros_like(wfl_acc)

        y = y_ref[...]                                    # (T, L) int32
        validf = (y >= 0).astype(jnp.float32)             # mask for lane padding

        # ---- softmax over the class axis, unrolled over C dense slabs ----
        xs = [x_ref[c] for c in range(C)]                 # list of (T, L) f32
        m = xs[0]
        for c in range(1, C):
            m = jnp.maximum(m, xs[c])
        es = [jnp.exp(xs[c] - m) for c in range(C)]
        denom = es[0]
        for c in range(1, C):
            denom = denom + es[c]
        inv_denom = pl.reciprocal(denom, approx=True)

        for c in range(C):
            xc = xs[c]
            tc = (y == c).astype(jnp.float32)             # one-hot slab
            pc = es[c] * inv_denom                        # softmax prob

            # ---- dice partial sums (accumulate full-tile, VPU only) ----
            inter_acc[c] = inter_acc[c] + pc * tc
            sump_acc[c] = sump_acc[c] + pc * validf
            cnt_acc[c] = cnt_acc[c] + tc

            # ---- focal (binary-with-logits per class) ----
            e = jnp.exp(-jnp.abs(xc))                     # exp(-|x|), reused twice
            logpt = jnp.maximum(xc, 0.0) - xc * tc + jnp.log(1.0 + e)
            # pt = sigmoid((2t-1)*x), reusing e
            z_nonneg = (xc * (2.0 * tc - 1.0)) >= 0.0
            pt = jnp.where(z_nonneg, 1.0, e) / (1.0 + e)
            omp = jnp.maximum(1.0 - pt, 0.0)
            omp2 = omp * omp
            ft = omp2 * omp2 * jnp.sqrt(omp)              # (1 - pt) ** 4.5
            w = (1.0 - ALPHA) + (2.0 * ALPHA - 1.0) * tc  # alpha*t + (1-alpha)*(1-t)
            ft_acc[c] = ft_acc[c] + ft * validf
            wfl_acc[c] = wfl_acc[c] + ft * logpt * w * validf

        @pl.when(is_last)
        def _finalize():
            dice_sum = 0.0
            focal_sum = 0.0
            for c in range(C):
                i_c = jnp.sum(inter_acc[c])
                sp_c = jnp.sum(sump_acc[c])
                cnt_c = jnp.sum(cnt_acc[c])
                ft_c = jnp.sum(ft_acc[c])
                wfl_c = jnp.sum(wfl_acc[c])

                card = sp_c + cnt_c
                score = (2.0 * i_c + SMOOTH) / jnp.maximum(card + SMOOTH, DICE_EPS)
                present = (cnt_c > 0.0).astype(jnp.float32)
                dice_sum = dice_sum + (1.0 - score) * present
                focal_sum = focal_sum + wfl_c / jnp.maximum(ft_c, FOCAL_NORM_EPS)

            total = dice_sum / C + focal_sum / jnp.float32(P_total)
            o_ref[0, 0] = total.astype(jnp.float32)

    return kernel


def custom_focal_dice_loss(x, y):
    """x: (N, C, H, W) float logits, y: (N, H, W) int labels. Returns scalar f32."""
    N, C, H, W = x.shape
    P = H * W
    P_total = N * P

    rows = -(-P // LANE)                      # ceil(P / 128)
    if rows <= MAX_TILE_ROWS:
        tile_rows = rows                      # full dim -> (8,128) rule satisfied
        rows_pad = rows
    else:
        tile_rows = MAX_TILE_ROWS
        rows_pad = -(-rows // tile_rows) * tile_rows
    P_pad = rows_pad * LANE

    # Free reshapes only (no transpose). Pad (if needed) with label -1 so padded
    # pixels are masked inside the kernel.
    x3 = x.astype(jnp.float32).reshape(N, C, P)
    y2 = y.astype(jnp.int32).reshape(N, P)
    if P_pad != P:
        x3 = jnp.pad(x3, ((0, 0), (0, 0), (0, P_pad - P)))
        y2 = jnp.pad(y2, ((0, 0), (0, P_pad - P)), constant_values=-1)
    x4 = x3.reshape(N, C, rows_pad, LANE)
    y3 = y2.reshape(N, rows_pad, LANE)

    n_ptiles = rows_pad // tile_rows
    grid = (N, n_ptiles)

    kernel = _make_kernel(C, P_total)
    out = pl.pallas_call(
        kernel,
        out_shape=jax.ShapeDtypeStruct((1, 1), jnp.float32),
        grid_spec=pltpu.PrefetchScalarGridSpec(
            num_scalar_prefetch=0,
            grid=grid,
            in_specs=[
                pl.BlockSpec((None, C, tile_rows, LANE),
                             lambda n, t: (n, 0, t, 0)),
                pl.BlockSpec((None, tile_rows, LANE),
                             lambda n, t: (n, t, 0)),
            ],
            out_specs=pl.BlockSpec(memory_space=pltpu.SMEM),
            scratch_shapes=[pltpu.VMEM((C, tile_rows, LANE), jnp.float32)
                            for _ in range(5)],
        ),
        compiler_params=pltpu.CompilerParams(
            dimension_semantics=("arbitrary", "arbitrary")),
    )(x4, y3)
    return out[0, 0]


def _reference_loss(x, y):
    """Pure-JAX reference of the smp Dice+Focal combination (for sanity check)."""
    N, C, H, W = x.shape
    P = N * H * W
    x2d = jnp.transpose(x, (1, 0, 2, 3)).reshape(C, P).astype(jnp.float32)
    y1d = y.reshape(P).astype(jnp.int32)
    onehot = jax.nn.one_hot(y1d, C, dtype=jnp.float32).T  # (C, P)

    probs = jax.nn.softmax(x2d, axis=0)
    inter = jnp.sum(probs * onehot, axis=1)
    card = jnp.sum(probs + onehot, axis=1)
    score = (2.0 * inter + SMOOTH) / jnp.maximum(card + SMOOTH, DICE_EPS)
    present = (jnp.sum(onehot, axis=1) > 0).astype(jnp.float32)
    dice = jnp.mean((1.0 - score) * present)

    t = onehot
    logpt = jnp.maximum(x2d, 0.0) - x2d * t + jnp.log1p(jnp.exp(-jnp.abs(x2d)))
    pt = jnp.exp(-logpt)
    ft = jnp.power(jnp.maximum(1.0 - pt, 0.0), GAMMA)
    w = ALPHA * t + (1.0 - ALPHA) * (1.0 - t)
    norm = jnp.maximum(jnp.sum(ft, axis=1), FOCAL_NORM_EPS)
    focal = jnp.sum(jnp.sum(ft * logpt * w, axis=1) / norm / P)
    return dice + focal


if __name__ == "__main__":
    N, C, H, W = 2, 4, 16, 16
    key = jax.random.PRNGKey(0)
    kx, ky = jax.random.split(key)
    x = jax.random.normal(kx, (N, C, H, W), dtype=jnp.float32)
    y = jax.random.randint(ky, (N, H, W), 0, C, dtype=jnp.int32)

    loss = jax.block_until_ready(custom_focal_dice_loss(x, y))
    ref = jax.block_until_ready(_reference_loss(x, y))
    assert jnp.isfinite(loss), "non-finite loss"
    assert jnp.allclose(loss, ref, rtol=1e-3, atol=5e-4), (loss, ref)
    print("KERNEL_OK")
</pallas_src>

<mosaic_0001>
module attributes {stable_mosaic.version = 11 : i64} {
  func.func @kernel(%arg0: i32, %arg1: i32, %arg2: memref<1x4x2x128xf32, #tpu.memory_space<vmem>>, %arg3: memref<1x2x128xi32, #tpu.memory_space<vmem>>, %arg4: memref<1x1xf32, #tpu.memory_space<smem>>, %arg5: memref<4x2x128xf32, #tpu.memory_space<vmem>>, %arg6: memref<4x2x128xf32, #tpu.memory_space<vmem>>, %arg7: memref<4x2x128xf32, #tpu.memory_space<vmem>>, %arg8: memref<4x2x128xf32, #tpu.memory_space<vmem>>, %arg9: memref<4x2x128xf32, #tpu.memory_space<vmem>>) attributes {dimension_semantics = [#tpu.dimension_semantics<arbitrary>, #tpu.dimension_semantics<arbitrary>], iteration_bounds = array<i64: 2, 1>, scalar_prefetch = 0 : i64, scratch_operands = 5 : i64, tpu.core_type = #tpu.core_type<tc>, window_params = [{transform_indices = @transform_0, window_bounds = array<i64: 1, 4, 2, 128>}, {transform_indices = @transform_1, window_bounds = array<i64: 1, 2, 128>}, {transform_indices = @transform_2, window_bounds = array<i64: 1, 1>}]} {
    %c0_i32 = arith.constant 0 : i32
    %0 = arith.cmpi eq, %arg0, %c0_i32 : i32
    %c0_i32_0 = arith.constant 0 : i32
    %1 = arith.cmpi eq, %arg1, %c0_i32_0 : i32
    %2 = arith.andi %0, %1 : i1
    %c1_i32 = arith.constant 1 : i32
    %3 = arith.cmpi eq, %arg0, %c1_i32 : i32
    %c0_i32_1 = arith.constant 0 : i32
    %4 = arith.cmpi eq, %arg1, %c0_i32_1 : i32
    %5 = arith.andi %3, %4 : i1
    %6 = arith.extui %2 : i1 to i32
    %c0_i32_2 = arith.constant 0 : i32
    %7 = arith.cmpi ne, %6, %c0_i32_2 : i32
    scf.if %7 {
      %cst_189 = arith.constant 0.000000e+00 : f32
      %347 = vector.broadcast %cst_189 : f32 to vector<4x2x128xf32>
      %c0_190 = arith.constant 0 : index
      %c0_191 = arith.constant 0 : index
      %c0_192 = arith.constant 0 : index
      %348 = vector.load %arg5[%c0_190, %c0_191, %c0_192] : memref<4x2x128xf32, #tpu.memory_space<vmem>>, vector<4x2x128xf32>
      tpu.vector_store %arg5[%c0_190, %c0_191, %c0_192], %347 {strides = array<i32>} : memref<4x2x128xf32, #tpu.memory_space<vmem>>, vector<4x2x128xf32>,
      %cst_193 = arith.constant 0.000000e+00 : f32
      %349 = vector.broadcast %cst_193 : f32 to vector<4x2x128xf32>
      %c0_194 = arith.constant 0 : index
      %c0_195 = arith.constant 0 : index
      %c0_196 = arith.constant 0 : index
      %350 = vector.load %arg6[%c0_194, %c0_195, %c0_196] : memref<4x2x128xf32, #tpu.memory_space<vmem>>, vector<4x2x128xf32>
      tpu.vector_store %arg6[%c0_194, %c0_195, %c0_196], %349 {strides = array<i32>} : memref<4x2x128xf32, #tpu.memory_space<vmem>>, vector<4x2x128xf32>,
      %cst_197 = arith.constant 0.000000e+00 : f32
      %351 = vector.broadcast %cst_197 : f32 to vector<4x2x128xf32>
      %c0_198 = arith.constant 0 : index
      %c0_199 = arith.constant 0 : index
      %c0_200 = arith.constant 0 : index
      %352 = vector.load %arg7[%c0_198, %c0_199, %c0_200] : memref<4x2x128xf32, #tpu.memory_space<vmem>>, vector<4x2x128xf32>
      tpu.vector_store %arg7[%c0_198, %c0_199, %c0_200], %351 {strides = array<i32>} : memref<4x2x128xf32, #tpu.memory_space<vmem>>, vector<4x2x128xf32>,
      %cst_201 = arith.constant 0.000000e+00 : f32
      %353 = vector.broadcast %cst_201 : f32 to vector<4x2x128xf32>
      %c0_202 = arith.constant 0 : index
      %c0_203 = arith.constant 0 : index
      %c0_204 = arith.constant 0 : index
      %354 = vector.load %arg8[%c0_202, %c0_203, %c0_204] : memref<4x2x128xf32, #tpu.memory_space<vmem>>, vector<4x2x128xf32>
      tpu.vector_store %arg8[%c0_202, %c0_203, %c0_204], %353 {strides = array<i32>} : memref<4x2x128xf32, #tpu.memory_space<vmem>>, vector<4x2x128xf32>,
      %cst_205 = arith.constant 0.000000e+00 : f32
      %355 = vector.broadcast %cst_205 : f32 to vector<4x2x128xf32>
      %c0_206 = arith.constant 0 : index
      %c0_207 = arith.constant 0 : index
      %c0_208 = arith.constant 0 : index
      %356 = vector.load %arg9[%c0_206, %c0_207, %c0_208] : memref<4x2x128xf32, #tpu.memory_space<vmem>>, vector<4x2x128xf32>
      tpu.vector_store %arg9[%c0_206, %c0_207, %c0_208], %355 {strides = array<i32>} : memref<4x2x128xf32, #tpu.memory_space<vmem>>, vector<4x2x128xf32>,
    } else {
    }
    %c0 = arith.constant 0 : index
    %c0_3 = arith.constant 0 : index
    %c0_4 = arith.constant 0 : index
    %8 = vector.load %arg3[%c0, %c0_3, %c0_4] : memref<1x2x128xi32, #tpu.memory_space<vmem>>, vector<1x2x128xi32>
    %9 = vector.shape_cast %8 : vector<1x2x128xi32> to vector<2x128xi32>
    %c0_i32_5 = arith.constant 0 : i32
    %10 = vector.broadcast %c0_i32_5 : i32 to vector<2x128xi32>
    %11 = arith.cmpi sge, %9, %10 : vector<2x128xi32>
    %12 = arith.extui %11 : vector<2x128xi1> to vector<2x128xi32>
    %13 = arith.sitofp %12 : vector<2x128xi32> to vector<2x128xf32>
    %c0_6 = arith.constant 0 : index
    %c0_7 = arith.constant 0 : index
    %c0_8 = arith.constant 0 : index
    %c0_9 = arith.constant 0 : index
    %14 = vector.load %arg2[%c0_6, %c0_7, %c0_8, %c0_9] : memref<1x4x2x128xf32, #tpu.memory_space<vmem>>, vector<1x1x2x128xf32>
    %15 = vector.shape_cast %14 : vector<1x1x2x128xf32> to vector<2x128xf32>
    %c0_10 = arith.constant 0 : index
    %c1 = arith.constant 1 : index
    %c0_11 = arith.constant 0 : index
    %c0_12 = arith.constant 0 : index
    %16 = vector.load %arg2[%c0_10, %c1, %c0_11, %c0_12] : memref<1x4x2x128xf32, #tpu.memory_space<vmem>>, vector<1x1x2x128xf32>
    %17 = vector.shape_cast %16 : vector<1x1x2x128xf32> to vector<2x128xf32>
    %c0_13 = arith.constant 0 : index
    %c2 = arith.constant 2 : index
    %c0_14 = arith.constant 0 : index
    %c0_15 = arith.constant 0 : index
    %18 = vector.load %arg2[%c0_13, %c2, %c0_14, %c0_15] : memref<1x4x2x128xf32, #tpu.memory_space<vmem>>, vector<1x1x2x128xf32>
    %19 = vector.shape_cast %18 : vector<1x1x2x128xf32> to vector<2x128xf32>
    %c0_16 = arith.constant 0 : index
    %c3 = arith.constant 3 : index
    %c0_17 = arith.constant 0 : index
    %c0_18 = arith.constant 0 : index
    %20 = vector.load %arg2[%c0_16, %c3, %c0_17, %c0_18] : memref<1x4x2x128xf32, #tpu.memory_space<vmem>>, vector<1x1x2x128xf32>
    %21 = vector.shape_cast %20 : vector<1x1x2x128xf32> to vector<2x128xf32>
    %22 = arith.maximumf %15, %17 : vector<2x128xf32>
    %23 = arith.maximumf %22, %19 : vector<2x128xf32>
    %24 = arith.maximumf %23, %21 : vector<2x128xf32>
    %25 = arith.subf %15, %24 : vector<2x128xf32>
    %26 = math.exp %25 : vector<2x128xf32>
    %27 = arith.subf %17, %24 : vector<2x128xf32>
    %28 = math.exp %27 : vector<2x128xf32>
    %29 = arith.subf %19, %24 : vector<2x128xf32>
    %30 = math.exp %29 : vector<2x128xf32>
    %31 = arith.subf %21, %24 : vector<2x128xf32>
    %32 = math.exp %31 : vector<2x128xf32>
    %33 = arith.addf %26, %28 : vector<2x128xf32>
    %34 = arith.addf %33, %30 : vector<2x128xf32>
    %35 = arith.addf %34, %32 : vector<2x128xf32>
    %36 = tpu.reciprocal %35 {approx = true} : vector<2x128xf32> -> vector<2x128xf32>
    %c0_i32_19 = arith.constant 0 : i32
    %37 = vector.broadcast %c0_i32_19 : i32 to vector<2x128xi32>
    %38 = arith.cmpi eq, %9, %37 : vector<2x128xi32>
    %39 = arith.extui %38 : vector<2x128xi1> to vector<2x128xi32>
    %40 = arith.sitofp %39 : vector<2x128xi32> to vector<2x128xf32>
    %41 = arith.mulf %26, %36 : vector<2x128xf32>
    %c0_20 = arith.constant 0 : index
    %c0_21 = arith.constant 0 : index
    %c0_22 = arith.constant 0 : index
    %42 = vector.load %arg5[%c0_20, %c0_21, %c0_22] : memref<4x2x128xf32, #tpu.memory_space<vmem>>, vector<1x2x128xf32>
    %43 = vector.shape_cast %42 : vector<1x2x128xf32> to vector<2x128xf32>
    %44 = arith.mulf %41, %40 : vector<2x128xf32>
    %45 = arith.addf %43, %44 : vector<2x128xf32>
    %c0_23 = arith.constant 0 : index
    %c0_24 = arith.constant 0 : index
    %c0_25 = arith.constant 0 : index
    %46 = vector.load %arg5[%c0_23, %c0_24, %c0_25] : memref<4x2x128xf32, #tpu.memory_space<vmem>>, vector<1x2x128xf32>
    %47 = vector.shape_cast %46 : vector<1x2x128xf32> to vector<2x128xf32>
    %48 = vector.shape_cast %45 : vector<2x128xf32> to vector<1x2x128xf32>
    tpu.vector_store %arg5[%c0_23, %c0_24, %c0_25], %48 {strides = array<i32>} : memref<4x2x128xf32, #tpu.memory_space<vmem>>, vector<1x2x128xf32>,
    %c0_26 = arith.constant 0 : index
    %c0_27 = arith.constant 0 : index
    %c0_28 = arith.constant 0 : index
    %49 = vector.load %arg6[%c0_26, %c0_27, %c0_28] : memref<4x2x128xf32, #tpu.memory_space<vmem>>, vector<1x2x128xf32>
    %50 = vector.shape_cast %49 : vector<1x2x128xf32> to vector<2x128xf32>
    %51 = arith.mulf %41, %13 : vector<2x128xf32>
    %52 = arith.addf %50, %51 : vector<2x128xf32>
    %c0_29 = arith.constant 0 : index
    %c0_30 = arith.constant 0 : index
    %c0_31 = arith.constant 0 : index
    %53 = vector.load %arg6[%c0_29, %c0_30, %c0_31] : memref<4x2x128xf32, #tpu.memory_space<vmem>>, vector<1x2x128xf32>
    %54 = vector.shape_cast %53 : vector<1x2x128xf32> to vector<2x128xf32>
    %55 = vector.shape_cast %52 : vector<2x128xf32> to vector<1x2x128xf32>
    tpu.vector_store %arg6[%c0_29, %c0_30, %c0_31], %55 {strides = array<i32>} : memref<4x2x128xf32, #tpu.memory_space<vmem>>, vector<1x2x128xf32>,
    %c0_32 = arith.constant 0 : index
    %c0_33 = arith.constant 0 : index
    %c0_34 = arith.constant 0 : index
    %56 = vector.load %arg7[%c0_32, %c0_33, %c0_34] : memref<4x2x128xf32, #tpu.memory_space<vmem>>, vector<1x2x128xf32>
    %57 = vector.shape_cast %56 : vector<1x2x128xf32> to vector<2x128xf32>
    %58 = arith.addf %57, %40 : vector<2x128xf32>
    %c0_35 = arith.constant 0 : index
    %c0_36 = arith.constant 0 : index
    %c0_37 = arith.constant 0 : index
    %59 = vector.load %arg7[%c0_35, %c0_36, %c0_37] : memref<4x2x128xf32, #tpu.memory_space<vmem>>, vector<1x2x128xf32>
    %60 = vector.shape_cast %59 : vector<1x2x128xf32> to vector<2x128xf32>
    %61 = vector.shape_cast %58 : vector<2x128xf32> to vector<1x2x128xf32>
    tpu.vector_store %arg7[%c0_35, %c0_36, %c0_37], %61 {strides = array<i32>} : memref<4x2x128xf32, #tpu.memory_space<vmem>>, vector<1x2x128xf32>,
    %62 = math.absf %15 : vector<2x128xf32>
    %cst = arith.constant 0.000000e+00 : f32
    %63 = vector.broadcast %cst : f32 to vector<2x128xf32>
    %64 = arith.subf %63, %62 : vector<2x128xf32>
    %65 = math.exp %64 : vector<2x128xf32>
    %cst_38 = arith.constant 0.000000e+00 : f32
    %66 = vector.broadcast %cst_38 : f32 to vector<2x128xf32>
    %67 = arith.maximumf %15, %66 : vector<2x128xf32>
    %68 = arith.mulf %15, %40 : vector<2x128xf32>
    %69 = arith.subf %67, %68 : vector<2x128xf32>
    %cst_39 = arith.constant 1.000000e+00 : f32
    %70 = vector.broadcast %cst_39 : f32 to vector<2x128xf32>
    %71 = arith.addf %70, %65 : vector<2x128xf32>
    %72 = math.log %71 : vector<2x128xf32>
    %73 = arith.addf %69, %72 : vector<2x128xf32>
    %cst_40 = arith.constant 2.000000e+00 : f32
    %74 = vector.broadcast %cst_40 : f32 to vector<2x128xf32>
    %75 = arith.mulf %74, %40 : vector<2x128xf32>
    %cst_41 = arith.constant 1.000000e+00 : f32
    %76 = vector.broadcast %cst_41 : f32 to vector<2x128xf32>
    %77 = arith.subf %75, %76 : vector<2x128xf32>
    %78 = arith.mulf %15, %77 : vector<2x128xf32>
    %cst_42 = arith.constant 0.000000e+00 : f32
    %79 = vector.broadcast %cst_42 : f32 to vector<2x128xf32>
    %80 = arith.cmpf oge, %78, %79 : vector<2x128xf32>
    %cst_43 = arith.constant 1.000000e+00 : f32
    %81 = vector.broadcast %cst_43 : f32 to vector<2x128xf32>
    %82 = arith.select %80, %81, %65 : vector<2x128xi1>, vector<2x128xf32>
    %cst_44 = arith.constant 1.000000e+00 : f32
    %83 = vector.broadcast %cst_44 : f32 to vector<2x128xf32>
    %84 = arith.addf %83, %65 : vector<2x128xf32>
    %85 = arith.divf %82, %84 : vector<2x128xf32>
    %cst_45 = arith.constant 1.000000e+00 : f32
    %86 = vector.broadcast %cst_45 : f32 to vector<2x128xf32>
    %87 = arith.subf %86, %85 : vector<2x128xf32>
    %cst_46 = arith.constant 0.000000e+00 : f32
    %88 = vector.broadcast %cst_46 : f32 to vector<2x128xf32>
    %89 = arith.maximumf %87, %88 : vector<2x128xf32>
    %90 = arith.mulf %89, %89 : vector<2x128xf32>
    %91 = arith.mulf %90, %90 : vector<2x128xf32>
    %92 = math.sqrt %89 : vector<2x128xf32>
    %93 = arith.mulf %91, %92 : vector<2x128xf32>
    %cst_47 = arith.constant -8.000000e-01 : f32
    %94 = vector.broadcast %cst_47 : f32 to vector<2x128xf32>
    %95 = arith.mulf %94, %40 : vector<2x128xf32>
    %cst_48 = arith.constant 0.899999976 : f32
    %96 = vector.broadcast %cst_48 : f32 to vector<2x128xf32>
    %97 = arith.addf %96, %95 : vector<2x128xf32>
    %c0_49 = arith.constant 0 : index
    %c0_50 = arith.constant 0 : index
    %c0_51 = arith.constant 0 : index
    %98 = vector.load %arg8[%c0_49, %c0_50, %c0_51] : memref<4x2x128xf32, #tpu.memory_space<vmem>>, vector<1x2x128xf32>
    %99 = vector.shape_cast %98 : vector<1x2x128xf32> to vector<2x128xf32>
    %100 = arith.mulf %93, %13 : vector<2x128xf32>
    %101 = arith.addf %99, %100 : vector<2x128xf32>
    %c0_52 = arith.constant 0 : index
    %c0_53 = arith.constant 0 : index
    %c0_54 = arith.constant 0 : index
    %102 = vector.load %arg8[%c0_52, %c0_53, %c0_54] : memref<4x2x128xf32, #tpu.memory_space<vmem>>, vector<1x2x128xf32>
    %103 = vector.shape_cast %102 : vector<1x2x128xf32> to vector<2x128xf32>
    %104 = vector.shape_cast %101 : vector<2x128xf32> to vector<1x2x128xf32>
    tpu.vector_store %arg8[%c0_52, %c0_53, %c0_54], %104 {strides = array<i32>} : memref<4x2x128xf32, #tpu.memory_space<vmem>>, vector<1x2x128xf32>,
    %c0_55 = arith.constant 0 : index
    %c0_56 = arith.constant 0 : index
    %c0_57 = arith.constant 0 : index
    %105 = vector.load %arg9[%c0_55, %c0_56, %c0_57] : memref<4x2x128xf32, #tpu.memory_space<vmem>>, vector<1x2x128xf32>
    %106 = vector.shape_cast %105 : vector<1x2x128xf32> to vector<2x128xf32>
    %107 = arith.mulf %93, %73 : vector<2x128xf32>
    %108 = arith.mulf %107, %97 : vector<2x128xf32>
    %109 = arith.mulf %108, %13 : vector<2x128xf32>
    %110 = arith.addf %106, %109 : vector<2x128xf32>
    %c0_58 = arith.constant 0 : index
    %c0_59 = arith.constant 0 : index
    %c0_60 = arith.constant 0 : index
    %111 = vector.load %arg9[%c0_58, %c0_59, %c0_60] : memref<4x2x128xf32, #tpu.memory_space<vmem>>, vector<1x2x128xf32>
    %112 = vector.shape_cast %111 : vector<1x2x128xf32> to vector<2x128xf32>
    %113 = vector.shape_cast %110 : vector<2x128xf32> to vector<1x2x128xf32>
    tpu.vector_store %arg9[%c0_58, %c0_59, %c0_60], %113 {strides = array<i32>} : memref<4x2x128xf32, #tpu.memory_space<vmem>>, vector<1x2x128xf32>,
    %c1_i32_61 = arith.constant 1 : i32
    %114 = vector.broadcast %c1_i32_61 : i32 to vector<2x128xi32>
    %115 = arith.cmpi eq, %9, %114 : vector<2x128xi32>
    %116 = arith.extui %115 : vector<2x128xi1> to vector<2x128xi32>
    %117 = arith.sitofp %116 : vector<2x128xi32> to vector<2x128xf32>
    %118 = arith.mulf %28, %36 : vector<2x128xf32>
    %c1_62 = arith.constant 1 : index
    %c0_63 = arith.constant 0 : index
    %c0_64 = arith.constant 0 : index
    %119 = vector.load %arg5[%c1_62, %c0_63, %c0_64] : memref<4x2x128xf32, #tpu.memory_space<vmem>>, vector<1x2x128xf32>
    %120 = vector.shape_cast %119 : vector<1x2x128xf32> to vector<2x128xf32>
    %121 = arith.mulf %118, %117 : vector<2x128xf32>
    %122 = arith.addf %120, %121 : vector<2x128xf32>
    %c1_65 = arith.constant 1 : index
    %c0_66 = arith.constant 0 : index
    %c0_67 = arith.constant 0 : index
    %123 = vector.load %arg5[%c1_65, %c0_66, %c0_67] : memref<4x2x128xf32, #tpu.memory_space<vmem>>, vector<1x2x128xf32>
    %124 = vector.shape_cast %123 : vector<1x2x128xf32> to vector<2x128xf32>
    %125 = vector.shape_cast %122 : vector<2x128xf32> to vector<1x2x128xf32>
    tpu.vector_store %arg5[%c1_65, %c0_66, %c0_67], %125 {strides = array<i32>} : memref<4x2x128xf32, #tpu.memory_space<vmem>>, vector<1x2x128xf32>,
    %c1_68 = arith.constant 1 : index
    %c0_69 = arith.constant 0 : index
    %c0_70 = arith.constant 0 : index
    %126 = vector.load %arg6[%c1_68, %c0_69, %c0_70] : memref<4x2x128xf32, #tpu.memory_space<vmem>>, vector<1x2x128xf32>
    %127 = vector.shape_cast %126 : vector<1x2x128xf32> to vector<2x128xf32>
    %128 = arith.mulf %118, %13 : vector<2x128xf32>
    %129 = arith.addf %127, %128 : vector<2x128xf32>
    %c1_71 = arith.constant 1 : index
    %c0_72 = arith.constant 0 : index
    %c0_73 = arith.constant 0 : index
    %130 = vector.load %arg6[%c1_71, %c0_72, %c0_73] : memref<4x2x128xf32, #tpu.memory_space<vmem>>, vector<1x2x128xf32>
    %131 = vector.shape_cast %130 : vector<1x2x128xf32> to vector<2x128xf32>
    %132 = vector.shape_cast %129 : vector<2x128xf32> to vector<1x2x128xf32>
    tpu.vector_store %arg6[%c1_71, %c0_72, %c0_73], %132 {strides = array<i32>} : memref<4x2x128xf32, #tpu.memory_space<vmem>>, vector<1x2x128xf32>,
    %c1_74 = arith.constant 1 : index
    %c0_75 = arith.constant 0 : index
    %c0_76 = arith.constant 0 : index
    %133 = vector.load %arg7[%c1_74, %c0_75, %c0_76] : memref<4x2x128xf32, #tpu.memory_space<vmem>>, vector<1x2x128xf32>
    %134 = vector.shape_cast %133 : vector<1x2x128xf32> to vector<2x128xf32>
    %135 = arith.addf %134, %117 : vector<2x128xf32>
    %c1_77 = arith.constant 1 : index
    %c0_78 = arith.constant 0 : index
    %c0_79 = arith.constant 0 : index
    %136 = vector.load %arg7[%c1_77, %c0_78, %c0_79] : memref<4x2x128xf32, #tpu.memory_space<vmem>>, vector<1x2x128xf32>
    %137 = vector.shape_cast %136 : vector<1x2x128xf32> to vector<2x128xf32>
    %138 = vector.shape_cast %135 : vector<2x128xf32> to vector<1x2x128xf32>
    tpu.vector_store %arg7[%c1_77, %c0_78, %c0_79], %138 {strides = array<i32>} : memref<4x2x128xf32, #tpu.memory_space<vmem>>, vector<1x2x128xf32>,
    %139 = math.absf %17 : vector<2x128xf32>
    %cst_80 = arith.constant 0.000000e+00 : f32
    %140 = vector.broadcast %cst_80 : f32 to vector<2x128xf32>
    %141 = arith.subf %140, %139 : vector<2x128xf32>
    %142 = math.exp %141 : vector<2x128xf32>
    %cst_81 = arith.constant 0.000000e+00 : f32
    %143 = vector.broadcast %cst_81 : f32 to vector<2x128xf32>
    %144 = arith.maximumf %17, %143 : vector<2x128xf32>
    %145 = arith.mulf %17, %117 : vector<2x128xf32>
    %146 = arith.subf %144, %145 : vector<2x128xf32>
    %cst_82 = arith.constant 1.000000e+00 : f32
    %147 = vector.broadcast %cst_82 : f32 to vector<2x128xf32>
    %148 = arith.addf %147, %142 : vector<2x128xf32>
    %149 = math.log %148 : vector<2x128xf32>
    %150 = arith.addf %146, %149 : vector<2x128xf32>
    %cst_83 = arith.constant 2.000000e+00 : f32
    %151 = vector.broadcast %cst_83 : f32 to vector<2x128xf32>
    %152 = arith.mulf %151, %117 : vector<2x128xf32>
    %cst_84 = arith.constant 1.000000e+00 : f32
    %153 = vector.broadcast %cst_84 : f32 to vector<2x128xf32>
    %154 = arith.subf %152, %153 : vector<2x128xf32>
    %155 = arith.mulf %17, %154 : vector<2x128xf32>
    %cst_85 = arith.constant 0.000000e+00 : f32
    %156 = vector.broadcast %cst_85 : f32 to vector<2x128xf32>
    %157 = arith.cmpf oge, %155, %156 : vector<2x128xf32>
    %cst_86 = arith.constant 1.000000e+00 : f32
    %158 = vector.broadcast %cst_86 : f32 to vector<2x128xf32>
    %159 = arith.select %157, %158, %142 : vector<2x128xi1>, vector<2x128xf32>
    %cst_87 = arith.constant 1.000000e+00 : f32
    %160 = vector.broadcast %cst_87 : f32 to vector<2x128xf32>
    %161 = arith.addf %160, %142 : vector<2x128xf32>
    %162 = arith.divf %159, %161 : vector<2x128xf32>
    %cst_88 = arith.constant 1.000000e+00 : f32
    %163 = vector.broadcast %cst_88 : f32 to vector<2x128xf32>
    %164 = arith.subf %163, %162 : vector<2x128xf32>
    %cst_89 = arith.constant 0.000000e+00 : f32
    %165 = vector.broadcast %cst_89 : f32 to vector<2x128xf32>
    %166 = arith.maximumf %164, %165 : vector<2x128xf32>
    %167 = arith.mulf %166, %166 : vector<2x128xf32>
    %168 = arith.mulf %167, %167 : vector<2x128xf32>
    %169 = math.sqrt %166 : vector<2x128xf32>
    %170 = arith.mulf %168, %169 : vector<2x128xf32>
    %cst_90 = arith.constant -8.000000e-01 : f32
    %171 = vector.broadcast %cst_90 : f32 to vector<2x128xf32>
    %172 = arith.mulf %171, %117 : vector<2x128xf32>
    %cst_91 = arith.constant 0.899999976 : f32
    %173 = vector.broadcast %cst_91 : f32 to vector<2x128xf32>
    %174 = arith.addf %173, %172 : vector<2x128xf32>
    %c1_92 = arith.constant 1 : index
    %c0_93 = arith.constant 0 : index
    %c0_94 = arith.constant 0 : index
    %175 = vector.load %arg8[%c1_92, %c0_93, %c0_94] : memref<4x2x128xf32, #tpu.memory_space<vmem>>, vector<1x2x128xf32>
    %176 = vector.shape_cast %175 : vector<1x2x128xf32> to vector<2x128xf32>
    %177 = arith.mulf %170, %13 : vector<2x128xf32>
    %178 = arith.addf %176, %177 : vector<2x128xf32>
    %c1_95 = arith.constant 1 : index
    %c0_96 = arith.constant 0 : index
    %c0_97 = arith.constant 0 : index
    %179 = vector.load %arg8[%c1_95, %c0_96, %c0_97] : memref<4x2x128xf32, #tpu.memory_space<vmem>>, vector<1x2x128xf32>
    %180 = vector.shape_cast %179 : vector<1x2x128xf32> to vector<2x128xf32>
    %181 = vector.shape_cast %178 : vector<2x128xf32> to vector<1x2x128xf32>
    tpu.vector_store %arg8[%c1_95, %c0_96, %c0_97], %181 {strides = array<i32>} : memref<4x2x128xf32, #tpu.memory_space<vmem>>, vector<1x2x128xf32>,
    %c1_98 = arith.constant 1 : index
    %c0_99 = arith.constant 0 : index
    %c0_100 = arith.constant 0 : index
    %182 = vector.load %arg9[%c1_98, %c0_99, %c0_100] : memref<4x2x128xf32, #tpu.memory_space<vmem>>, vector<1x2x128xf32>
    %183 = vector.shape_cast %182 : vector<1x2x128xf32> to vector<2x128xf32>
    %184 = arith.mulf %170, %150 : vector<2x128xf32>
    %185 = arith.mulf %184, %174 : vector<2x128xf32>
    %186 = arith.mulf %185, %13 : vector<2x128xf32>
    %187 = arith.addf %183, %186 : vector<2x128xf32>
    %c1_101 = arith.constant 1 : index
    %c0_102 = arith.constant 0 : index
    %c0_103 = arith.constant 0 : index
    %188 = vector.load %arg9[%c1_101, %c0_102, %c0_103] : memref<4x2x128xf32, #tpu.memory_space<vmem>>, vector<1x2x128xf32>
    %189 = vector.shape_cast %188 : vector<1x2x128xf32> to vector<2x128xf32>
    %190 = vector.shape_cast %187 : vector<2x128xf32> to vector<1x2x128xf32>
    tpu.vector_store %arg9[%c1_101, %c0_102, %c0_103], %190 {strides = array<i32>} : memref<4x2x128xf32, #tpu.memory_space<vmem>>, vector<1x2x128xf32>,
    %c2_i32 = arith.constant 2 : i32
    %191 = vector.broadcast %c2_i32 : i32 to vector<2x128xi32>
    %192 = arith.cmpi eq, %9, %191 : vector<2x128xi32>
    %193 = arith.extui %192 : vector<2x128xi1> to vector<2x128xi32>
    %194 = arith.sitofp %193 : vector<2x128xi32> to vector<2x128xf32>
    %195 = arith.mulf %30, %36 : vector<2x128xf32>
    %c2_104 = arith.constant 2 : index
    %c0_105 = arith.constant 0 : index
    %c0_106 = arith.constant 0 : index
    %196 = vector.load %arg5[%c2_104, %c0_105, %c0_106] : memref<4x2x128xf32, #tpu.memory_space<vmem>>, vector<1x2x128xf32>
    %197 = vector.shape_cast %196 : vector<1x2x128xf32> to vector<2x128xf32>
    %198 = arith.mulf %195, %194 : vector<2x128xf32>
    %199 = arith.addf %197, %198 : vector<2x128xf32>
    %c2_107 = arith.constant 2 : index
    %c0_108 = arith.constant 0 : index
    %c0_109 = arith.constant 0 : index
    %200 = vector.load %arg5[%c2_107, %c0_108, %c0_109] : memref<4x2x128xf32, #tpu.memory_space<vmem>>, vector<1x2x128xf32>
    %201 = vector.shape_cast %200 : vector<1x2x128xf32> to vector<2x128xf32>
    %202 = vector.shape_cast %199 : vector<2x128xf32> to vector<1x2x128xf32>
    tpu.vector_store %arg5[%c2_107, %c0_108, %c0_109], %202 {strides = array<i32>} : memref<4x2x128xf32, #tpu.memory_space<vmem>>, vector<1x2x128xf32>,
    %c2_110 = arith.constant 2 : index
    %c0_111 = arith.constant 0 : index
    %c0_112 = arith.constant 0 : index
    %203 = vector.load %arg6[%c2_110, %c0_111, %c0_112] : memref<4x2x128xf32, #tpu.memory_space<vmem>>, vector<1x2x128xf32>
    %204 = vector.shape_cast %203 : vector<1x2x128xf32> to vector<2x128xf32>
    %205 = arith.mulf %195, %13 : vector<2x128xf32>
    %206 = arith.addf %204, %205 : vector<2x128xf32>
    %c2_113 = arith.constant 2 : index
    %c0_114 = arith.constant 0 : index
    %c0_115 = arith.constant 0 : index
    %207 = vector.load %arg6[%c2_113, %c0_114, %c0_115] : memref<4x2x128xf32, #tpu.memory_space<vmem>>, vector<1x2x128xf32>
    %208 = vector.shape_cast %207 : vector<1x2x128xf32> to vector<2x128xf32>
    %209 = vector.shape_cast %206 : vector<2x128xf32> to vector<1x2x128xf32>
    tpu.vector_store %arg6[%c2_113, %c0_114, %c0_115], %209 {strides = array<i32>} : memref<4x2x128xf32, #tpu.memory_space<vmem>>, vector<1x2x128xf32>,
    %c2_116 = arith.constant 2 : index
    %c0_117 = arith.constant 0 : index
    %c0_118 = arith.constant 0 : index
    %210 = vector.load %arg7[%c2_116, %c0_117, %c0_118] : memref<4x2x128xf32, #tpu.memory_space<vmem>>, vector<1x2x128xf32>
    %211 = vector.shape_cast %210 : vector<1x2x128xf32> to vector<2x128xf32>
    %212 = arith.addf %211, %194 : vector<2x128xf32>
    %c2_119 = arith.constant 2 : index
    %c0_120 = arith.constant 0 : index
    %c0_121 = arith.constant 0 : index
    %213 = vector.load %arg7[%c2_119, %c0_120, %c0_121] : memref<4x2x128xf32, #tpu.memory_space<vmem>>, vector<1x2x128xf32>
    %214 = vector.shape_cast %213 : vector<1x2x128xf32> to vector<2x128xf32>
    %215 = vector.shape_cast %212 : vector<2x128xf32> to vector<1x2x128xf32>
    tpu.vector_store %arg7[%c2_119, %c0_120, %c0_121], %215 {strides = array<i32>} : memref<4x2x128xf32, #tpu.memory_space<vmem>>, vector<1x2x128xf32>,
    %216 = math.absf %19 : vector<2x128xf32>
    %cst_122 = arith.constant 0.000000e+00 : f32
    %217 = vector.broadcast %cst_122 : f32 to vector<2x128xf32>
    %218 = arith.subf %217, %216 : vector<2x128xf32>
    %219 = math.exp %218 : vector<2x128xf32>
    %cst_123 = arith.constant 0.000000e+00 : f32
    %220 = vector.broadcast %cst_123 : f32 to vector<2x128xf32>
    %221 = arith.maximumf %19, %220 : vector<2x128xf32>
    %222 = arith.mulf %19, %194 : vector<2x128xf32>
    %223 = arith.subf %221, %222 : vector<2x128xf32>
    %cst_124 = arith.constant 1.000000e+00 : f32
    %224 = vector.broadcast %cst_124 : f32 to vector<2x128xf32>
    %225 = arith.addf %224, %219 : vector<2x128xf32>
    %226 = math.log %225 : vector<2x128xf32>
    %227 = arith.addf %223, %226 : vector<2x128xf32>
    %cst_125 = arith.constant 2.000000e+00 : f32
    %228 = vector.broadcast %cst_125 : f32 to vector<2x128xf32>
    %229 = arith.mulf %228, %194 : vector<2x128xf32>
    %cst_126 = arith.constant 1.000000e+00 : f32
    %230 = vector.broadcast %cst_126 : f32 to vector<2x128xf32>
    %231 = arith.subf %229, %230 : vector<2x128xf32>
    %232 = arith.mulf %19, %231 : vector<2x128xf32>
    %cst_127 = arith.constant 0.000000e+00 : f32
    %233 = vector.broadcast %cst_127 : f32 to vector<2x128xf32>
    %234 = arith.cmpf oge, %232, %233 : vector<2x128xf32>
    %cst_128 = arith.constant 1.000000e+00 : f32
    %235 = vector.broadcast %cst_128 : f32 to vector<2x128xf32>
    %236 = arith.select %234, %235, %219 : vector<2x128xi1>, vector<2x128xf32>
    %cst_129 = arith.constant 1.000000e+00 : f32
    %237 = vector.broadcast %cst_129 : f32 to vector<2x128xf32>
    %238 = arith.addf %237, %219 : vector<2x128xf32>
    %239 = arith.divf %236, %238 : vector<2x128xf32>
    %cst_130 = arith.constant 1.000000e+00 : f32
    %240 = vector.broadcast %cst_130 : f32 to vector<2x128xf32>
    %241 = arith.subf %240, %239 : vector<2x128xf32>
    %cst_131 = arith.constant 0.000000e+00 : f32
    %242 = vector.broadcast %cst_131 : f32 to vector<2x128xf32>
    %243 = arith.maximumf %241, %242 : vector<2x128xf32>
    %244 = arith.mulf %243, %243 : vector<2x128xf32>
    %245 = arith.mulf %244, %244 : vector<2x128xf32>
    %246 = math.sqrt %243 : vector<2x128xf32>
    %247 = arith.mulf %245, %246 : vector<2x128xf32>
    %cst_132 = arith.constant -8.000000e-01 : f32
    %248 = vector.broadcast %cst_132 : f32 to vector<2x128xf32>
    %249 = arith.mulf %248, %194 : vector<2x128xf32>
    %cst_133 = arith.constant 0.899999976 : f32
    %250 = vector.broadcast %cst_133 : f32 to vector<2x128xf32>
    %251 = arith.addf %250, %249 : vector<2x128xf32>
    %c2_134 = arith.constant 2 : index
    %c0_135 = arith.constant 0 : index
    %c0_136 = arith.constant 0 : index
    %252 = vector.load %arg8[%c2_134, %c0_135, %c0_136] : memref<4x2x128xf32, #tpu.memory_space<vmem>>, vector<1x2x128xf32>
    %253 = vector.shape_cast %252 : vector<1x2x128xf32> to vector<2x128xf32>
    %254 = arith.mulf %247, %13 : vector<2x128xf32>
    %255 = arith.addf %253, %254 : vector<2x128xf32>
    %c2_137 = arith.constant 2 : index
    %c0_138 = arith.constant 0 : index
    %c0_139 = arith.constant 0 : index
    %256 = vector.load %arg8[%c2_137, %c0_138, %c0_139] : memref<4x2x128xf32, #tpu.memory_space<vmem>>, vector<1x2x128xf32>
    %257 = vector.shape_cast %256 : vector<1x2x128xf32> to vector<2x128xf32>
    %258 = vector.shape_cast %255 : vector<2x128xf32> to vector<1x2x128xf32>
    tpu.vector_store %arg8[%c2_137, %c0_138, %c0_139], %258 {strides = array<i32>} : memref<4x2x128xf32, #tpu.memory_space<vmem>>, vector<1x2x128xf32>,
    %c2_140 = arith.constant 2 : index
    %c0_141 = arith.constant 0 : index
    %c0_142 = arith.constant 0 : index
    %259 = vector.load %arg9[%c2_140, %c0_141, %c0_142] : memref<4x2x128xf32, #tpu.memory_space<vmem>>, vector<1x2x128xf32>
    %260 = vector.shape_cast %259 : vector<1x2x128xf32> to vector<2x128xf32>
    %261 = arith.mulf %247, %227 : vector<2x128xf32>
    %262 = arith.mulf %261, %251 : vector<2x128xf32>
    %263 = arith.mulf %262, %13 : vector<2x128xf32>
    %264 = arith.addf %260, %263 : vector<2x128xf32>
    %c2_143 = arith.constant 2 : index
    %c0_144 = arith.constant 0 : index
    %c0_145 = arith.constant 0 : index
    %265 = vector.load %arg9[%c2_143, %c0_144, %c0_145] : memref<4x2x128xf32, #tpu.memory_space<vmem>>, vector<1x2x128xf32>
    %266 = vector.shape_cast %265 : vector<1x2x128xf32> to vector<2x128xf32>
    %267 = vector.shape_cast %264 : vector<2x128xf32> to vector<1x2x128xf32>
    tpu.vector_store %arg9[%c2_143, %c0_144, %c0_145], %267 {strides = array<i32>} : memref<4x2x128xf32, #tpu.memory_space<vmem>>, vector<1x2x128xf32>,
    %c3_i32 = arith.constant 3 : i32
    %268 = vector.broadcast %c3_i32 : i32 to vector<2x128xi32>
    %269 = arith.cmpi eq, %9, %268 : vector<2x128xi32>
    %270 = arith.extui %269 : vector<2x128xi1> to vector<2x128xi32>
    %271 = arith.sitofp %270 : vector<2x128xi32> to vector<2x128xf32>
    %272 = arith.mulf %32, %36 : vector<2x128xf32>
    %c3_146 = arith.constant 3 : index
    %c0_147 = arith.constant 0 : index
    %c0_148 = arith.constant 0 : index
    %273 = vector.load %arg5[%c3_146, %c0_147, %c0_148] : memref<4x2x128xf32, #tpu.memory_space<vmem>>, vector<1x2x128xf32>
    %274 = vector.shape_cast %273 : vector<1x2x128xf32> to vector<2x128xf32>
    %275 = arith.mulf %272, %271 : vector<2x128xf32>
    %276 = arith.addf %274, %275 : vector<2x128xf32>
    %c3_149 = arith.constant 3 : index
    %c0_150 = arith.constant 0 : index
    %c0_151 = arith.constant 0 : index
    %277 = vector.load %arg5[%c3_149, %c0_150, %c0_151] : memref<4x2x128xf32, #tpu.memory_space<vmem>>, vector<1x2x128xf32>
    %278 = vector.shape_cast %277 : vector<1x2x128xf32> to vector<2x128xf32>
    %279 = vector.shape_cast %276 : vector<2x128xf32> to vector<1x2x128xf32>
    tpu.vector_store %arg5[%c3_149, %c0_150, %c0_151], %279 {strides = array<i32>} : memref<4x2x128xf32, #tpu.memory_space<vmem>>, vector<1x2x128xf32>,
    %c3_152 = arith.constant 3 : index
    %c0_153 = arith.constant 0 : index
    %c0_154 = arith.constant 0 : index
    %280 = vector.load %arg6[%c3_152, %c0_153, %c0_154] : memref<4x2x128xf32, #tpu.memory_space<vmem>>, vector<1x2x128xf32>
    %281 = vector.shape_cast %280 : vector<1x2x128xf32> to vector<2x128xf32>
    %282 = arith.mulf %272, %13 : vector<2x128xf32>
    %283 = arith.addf %281, %282 : vector<2x128xf32>
    %c3_155 = arith.constant 3 : index
    %c0_156 = arith.constant 0 : index
    %c0_157 = arith.constant 0 : index
    %284 = vector.load %arg6[%c3_155, %c0_156, %c0_157] : memref<4x2x128xf32, #tpu.memory_space<vmem>>, vector<1x2x128xf32>
    %285 = vector.shape_cast %284 : vector<1x2x128xf32> to vector<2x128xf32>
    %286 = vector.shape_cast %283 : vector<2x128xf32> to vector<1x2x128xf32>
    tpu.vector_store %arg6[%c3_155, %c0_156, %c0_157], %286 {strides = array<i32>} : memref<4x2x128xf32, #tpu.memory_space<vmem>>, vector<1x2x128xf32>,
    %c3_158 = arith.constant 3 : index
    %c0_159 = arith.constant 0 : index
    %c0_160 = arith.constant 0 : index
    %287 = vector.load %arg7[%c3_158, %c0_159, %c0_160] : memref<4x2x128xf32, #tpu.memory_space<vmem>>, vector<1x2x128xf32>
    %288 = vector.shape_cast %287 : vector<1x2x128xf32> to vector<2x128xf32>
    %289 = arith.addf %288, %271 : vector<2x128xf32>
    %c3_161 = arith.constant 3 : index
    %c0_162 = arith.constant 0 : index
    %c0_163 = arith.constant 0 : index
    %290 = vector.load %arg7[%c3_161, %c0_162, %c0_163] : memref<4x2x128xf32, #tpu.memory_space<vmem>>, vector<1x2x128xf32>
    %291 = vector.shape_cast %290 : vector<1x2x128xf32> to vector<2x128xf32>
    %292 = vector.shape_cast %289 : vector<2x128xf32> to vector<1x2x128xf32>
    tpu.vector_store %arg7[%c3_161, %c0_162, %c0_163], %292 {strides = array<i32>} : memref<4x2x128xf32, #tpu.memory_space<vmem>>, vector<1x2x128xf32>,
    %293 = math.absf %21 : vector<2x128xf32>
    %cst_164 = arith.constant 0.000000e+00 : f32
    %294 = vector.broadcast %cst_164 : f32 to vector<2x128xf32>
    %295 = arith.subf %294, %293 : vector<2x128xf32>
    %296 = math.exp %295 : vector<2x128xf32>
    %cst_165 = arith.constant 0.000000e+00 : f32
    %297 = vector.broadcast %cst_165 : f32 to vector<2x128xf32>
    %298 = arith.maximumf %21, %297 : vector<2x128xf32>
    %299 = arith.mulf %21, %271 : vector<2x128xf32>
    %300 = arith.subf %298, %299 : vector<2x128xf32>
    %cst_166 = arith.constant 1.000000e+00 : f32
    %301 = vector.broadcast %cst_166 : f32 to vector<2x128xf32>
    %302 = arith.addf %301, %296 : vector<2x128xf32>
    %303 = math.log %302 : vector<2x128xf32>
    %304 = arith.addf %300, %303 : vector<2x128xf32>
    %cst_167 = arith.constant 2.000000e+00 : f32
    %305 = vector.broadcast %cst_167 : f32 to vector<2x128xf32>
    %306 = arith.mulf %305, %271 : vector<2x128xf32>
    %cst_168 = arith.constant 1.000000e+00 : f32
    %307 = vector.broadcast %cst_168 : f32 to vector<2x128xf32>
    %308 = arith.subf %306, %307 : vector<2x128xf32>
    %309 = arith.mulf %21, %308 : vector<2x128xf32>
    %cst_169 = arith.constant 0.000000e+00 : f32
    %310 = vector.broadcast %cst_169 : f32 to vector<2x128xf32>
    %311 = arith.cmpf oge, %309, %310 : vector<2x128xf32>
    %cst_170 = arith.constant 1.000000e+00 : f32
    %312 = vector.broadcast %cst_170 : f32 to vector<2x128xf32>
    %313 = arith.select %311, %312, %296 : vector<2x128xi1>, vector<2x128xf32>
    %cst_171 = arith.constant 1.000000e+00 : f32
    %314 = vector.broadcast %cst_171 : f32 to vector<2x128xf32>
    %315 = arith.addf %314, %296 : vector<2x128xf32>
    %316 = arith.divf %313, %315 : vector<2x128xf32>
    %cst_172 = arith.constant 1.000000e+00 : f32
    %317 = vector.broadcast %cst_172 : f32 to vector<2x128xf32>
    %318 = arith.subf %317, %316 : vector<2x128xf32>
    %cst_173 = arith.constant 0.000000e+00 : f32
    %319 = vector.broadcast %cst_173 : f32 to vector<2x128xf32>
    %320 = arith.maximumf %318, %319 : vector<2x128xf32>
    %321 = arith.mulf %320, %320 : vector<2x128xf32>
    %322 = arith.mulf %321, %321 : vector<2x128xf32>
    %323 = math.sqrt %320 : vector<2x128xf32>
    %324 = arith.mulf %322, %323 : vector<2x128xf32>
    %cst_174 = arith.constant -8.000000e-01 : f32
    %325 = vector.broadcast %cst_174 : f32 to vector<2x128xf32>
    %326 = arith.mulf %325, %271 : vector<2x128xf32>
    %cst_175 = arith.constant 0.899999976 : f32
    %327 = vector.broadcast %cst_175 : f32 to vector<2x128xf32>
    %328 = arith.addf %327, %326 : vector<2x128xf32>
    %c3_176 = arith.constant 3 : index
    %c0_177 = arith.constant 0 : index
    %c0_178 = arith.constant 0 : index
    %329 = vector.load %arg8[%c3_176, %c0_177, %c0_178] : memref<4x2x128xf32, #tpu.memory_space<vmem>>, vector<1x2x128xf32>
    %330 = vector.shape_cast %329 : vector<1x2x128xf32> to vector<2x128xf32>
    %331 = arith.mulf %324, %13 : vector<2x128xf32>
    %332 = arith.addf %330, %331 : vector<2x128xf32>
    %c3_179 = arith.constant 3 : index
    %c0_180 = arith.constant 0 : index
    %c0_181 = arith.constant 0 : index
    %333 = vector.load %arg8[%c3_179, %c0_180, %c0_181] : memref<4x2x128xf32, #tpu.memory_space<vmem>>, vector<1x2x128xf32>
    %334 = vector.shape_cast %333 : vector<1x2x128xf32> to vector<2x128xf32>
    %335 = vector.shape_cast %332 : vector<2x128xf32> to vector<1x2x128xf32>
    tpu.vector_store %arg8[%c3_179, %c0_180, %c0_181], %335 {strides = array<i32>} : memref<4x2x128xf32, #tpu.memory_space<vmem>>, vector<1x2x128xf32>,
    %c3_182 = arith.constant 3 : index
    %c0_183 = arith.constant 0 : index
    %c0_184 = arith.constant 0 : index
    %336 = vector.load %arg9[%c3_182, %c0_183, %c0_184] : memref<4x2x128xf32, #tpu.memory_space<vmem>>, vector<1x2x128xf32>
    %337 = vector.shape_cast %336 : vector<1x2x128xf32> to vector<2x128xf32>
    %338 = arith.mulf %324, %304 : vector<2x128xf32>
    %339 = arith.mulf %338, %328 : vector<2x128xf32>
    %340 = arith.mulf %339, %13 : vector<2x128xf32>
    %341 = arith.addf %337, %340 : vector<2x128xf32>
    %c3_185 = arith.constant 3 : index
    %c0_186 = arith.constant 0 : index
    %c0_187 = arith.constant 0 : index
    %342 = vector.load %arg9[%c3_185, %c0_186, %c0_187] : memref<4x2x128xf32, #tpu.memory_space<vmem>>, vector<1x2x128xf32>
    %343 = vector.shape_cast %342 : vector<1x2x128xf32> to vector<2x128xf32>
    %344 = vector.shape_cast %341 : vector<2x128xf32> to vector<1x2x128xf32>
    tpu.vector_store %arg9[%c3_185, %c0_186, %c0_187], %344 {strides = array<i32>} : memref<4x2x128xf32, #tpu.memory_space<vmem>>, vector<1x2x128xf32>,
    %345 = arith.extui %5 : i1 to i32
    %c0_i32_188 = arith.constant 0 : i32
    %346 = arith.cmpi ne, %345, %c0_i32_188 : i32
    scf.if %346 {
      %c0_189 = arith.constant 0 : index
      %c0_190 = arith.constant 0 : index
      %c0_191 = arith.constant 0 : index
      %347 = vector.load %arg5[%c0_189, %c0_190, %c0_191] : memref<4x2x128xf32, #tpu.memory_space<vmem>>, vector<1x2x128xf32>
      %348 = vector.shape_cast %347 : vector<1x2x128xf32> to vector<2x128xf32>
      %349 = vector.shape_cast %348 : vector<2x128xf32> to vector<1x2x128xf32>
      %cst_192 = arith.constant dense<0.000000e+00> : vector<1xf32>
      %350 = vector.multi_reduction <add>, %349, %cst_192 [1, 2] : vector<1x2x128xf32> to vector<1xf32>
      %351 = vector.shape_cast %350 : vector<1xf32> to vector<1x1x1xf32>
      %352 = vector.extract %351[0, 0, 0] : f32 from vector<1x1x1xf32>
      %c0_193 = arith.constant 0 : index
      %c0_194 = arith.constant 0 : index
      %c0_195 = arith.constant 0 : index
      %353 = vector.load %arg6[%c0_193, %c0_194, %c0_195] : memref<4x2x128xf32, #tpu.memory_space<vmem>>, vector<1x2x128xf32>
      %354 = vector.shape_cast %353 : vector<1x2x128xf32> to vector<2x128xf32>
      %355 = vector.shape_cast %354 : vector<2x128xf32> to vector<1x2x128xf32>
      %cst_196 = arith.constant dense<0.000000e+00> : vector<1xf32>
      %356 = vector.multi_reduction <add>, %355, %cst_196 [1, 2] : vector<1x2x128xf32> to vector<1xf32>
      %357 = vector.shape_cast %356 : vector<1xf32> to vector<1x1x1xf32>
      %358 = vector.extract %357[0, 0, 0] : f32 from vector<1x1x1xf32>
      %c0_197 = arith.constant 0 : index
      %c0_198 = arith.constant 0 : index
      %c0_199 = arith.constant 0 : index
      %359 = vector.load %arg7[%c0_197, %c0_198, %c0_199] : memref<4x2x128xf32, #tpu.memory_space<vmem>>, vector<1x2x128xf32>
      %360 = vector.shape_cast %359 : vector<1x2x128xf32> to vector<2x128xf32>
      %361 = vector.shape_cast %360 : vector<2x128xf32> to vector<1x2x128xf32>
      %cst_200 = arith.constant dense<0.000000e+00> : vector<1xf32>
      %362 = vector.multi_reduction <add>, %361, %cst_200 [1, 2] : vector<1x2x128xf32> to vector<1xf32>
      %363 = vector.shape_cast %362 : vector<1xf32> to vector<1x1x1xf32>
      %364 = vector.extract %363[0, 0, 0] : f32 from vector<1x1x1xf32>
      %c0_201 = arith.constant 0 : index
      %c0_202 = arith.constant 0 : index
      %c0_203 = arith.constant 0 : index
      %365 = vector.load %arg8[%c0_201, %c0_202, %c0_203] : memref<4x2x128xf32, #tpu.memory_space<vmem>>, vector<1x2x128xf32>
      %366 = vector.shape_cast %365 : vector<1x2x128xf32> to vector<2x128xf32>
      %367 = vector.shape_cast %366 : vector<2x128xf32> to vector<1x2x128xf32>
      %cst_204 = arith.constant dense<0.000000e+00> : vector<1xf32>
      %368 = vector.multi_reduction <add>, %367, %cst_204 [1, 2] : vector<1x2x128xf32> to vector<1xf32>
      %369 = vector.shape_cast %368 : vector<1xf32> to vector<1x1x1xf32>
      %370 = vector.extract %369[0, 0, 0] : f32 from vector<1x1x1xf32>
      %c0_205 = arith.constant 0 : index
      %c0_206 = arith.constant 0 : index
      %c0_207 = arith.constant 0 : index
      %371 = vector.load %arg9[%c0_205, %c0_206, %c0_207] : memref<4x2x128xf32, #tpu.memory_space<vmem>>, vector<1x2x128xf32>
      %372 = vector.shape_cast %371 : vector<1x2x128xf32> to vector<2x128xf32>
      %373 = vector.shape_cast %372 : vector<2x128xf32> to vector<1x2x128xf32>
      %cst_208 = arith.constant dense<0.000000e+00> : vector<1xf32>
      %374 = vector.multi_reduction <add>, %373, %cst_208 [1, 2] : vector<1x2x128xf32> to vector<1xf32>
      %375 = vector.shape_cast %374 : vector<1xf32> to vector<1x1x1xf32>
      %376 = vector.extract %375[0, 0, 0] : f32 from vector<1x1x1xf32>
      %377 = arith.addf %358, %364 : f32
      %cst_209 = arith.constant 2.000000e+00 : f32
      %378 = arith.mulf %cst_209, %352 : f32
      %cst_210 = arith.constant 9.99999974E-6 : f32
      %379 = arith.addf %378, %cst_210 : f32
      %cst_211 = arith.constant 9.99999974E-6 : f32
      %380 = arith.addf %377, %cst_211 : f32
      %cst_212 = arith.constant 1.000000e-07 : f32
      %381 = arith.maximumf %380, %cst_212 : f32
      %382 = arith.divf %379, %381 : f32
      %cst_213 = arith.constant 0.000000e+00 : f32
      %383 = arith.cmpf ogt, %364, %cst_213 : f32
      %384 = arith.extui %383 : i1 to i32
      %385 = arith.sitofp %384 : i32 to f32
      %cst_214 = arith.constant 1.000000e+00 : f32
      %386 = arith.subf %cst_214, %382 : f32
      %387 = arith.mulf %386, %385 : f32
      %cst_215 = arith.constant 0.000000e+00 : f32
      %388 = arith.addf %cst_215, %387 : f32
      %cst_216 = arith.constant 9.99999997E-7 : f32
      %389 = arith.maximumf %370, %cst_216 : f32
      %390 = arith.divf %376, %389 : f32
      %cst_217 = arith.constant 0.000000e+00 : f32
      %391 = arith.addf %cst_217, %390 : f32
      %c1_218 = arith.constant 1 : index
      %c0_219 = arith.constant 0 : index
      %c0_220 = arith.constant 0 : index
      %392 = vector.load %arg5[%c1_218, %c0_219, %c0_220] : memref<4x2x128xf32, #tpu.memory_space<vmem>>, vector<1x2x128xf32>
      %393 = vector.shape_cast %392 : vector<1x2x128xf32> to vector<2x128xf32>
      %394 = vector.shape_cast %393 : vector<2x128xf32> to vector<1x2x128xf32>
      %cst_221 = arith.constant dense<0.000000e+00> : vector<1xf32>
      %395 = vector.multi_reduction <add>, %394, %cst_221 [1, 2] : vector<1x2x128xf32> to vector<1xf32>
      %396 = vector.shape_cast %395 : vector<1xf32> to vector<1x1x1xf32>
      %397 = vector.extract %396[0, 0, 0] : f32 from vector<1x1x1xf32>
      %c1_222 = arith.constant 1 : index
      %c0_223 = arith.constant 0 : index
      %c0_224 = arith.constant 0 : index
      %398 = vector.load %arg6[%c1_222, %c0_223, %c0_224] : memref<4x2x128xf32, #tpu.memory_space<vmem>>, vector<1x2x128xf32>
      %399 = vector.shape_cast %398 : vector<1x2x128xf32> to vector<2x128xf32>
      %400 = vector.shape_cast %399 : vector<2x128xf32> to vector<1x2x128xf32>
      %cst_225 = arith.constant dense<0.000000e+00> : vector<1xf32>
      %401 = vector.multi_reduction <add>, %400, %cst_225 [1, 2] : vector<1x2x128xf32> to vector<1xf32>
      %402 = vector.shape_cast %401 : vector<1xf32> to vector<1x1x1xf32>
      %403 = vector.extract %402[0, 0, 0] : f32 from vector<1x1x1xf32>
      %c1_226 = arith.constant 1 : index
      %c0_227 = arith.constant 0 : index
      %c0_228 = arith.constant 0 : index
      %404 = vector.load %arg7[%c1_226, %c0_227, %c0_228] : memref<4x2x128xf32, #tpu.memory_space<vmem>>, vector<1x2x128xf32>
      %405 = vector.shape_cast %404 : vector<1x2x128xf32> to vector<2x128xf32>
      %406 = vector.shape_cast %405 : vector<2x128xf32> to vector<1x2x128xf32>
      %cst_229 = arith.constant dense<0.000000e+00> : vector<1xf32>
      %407 = vector.multi_reduction <add>, %406, %cst_229 [1, 2] : vector<1x2x128xf32> to vector<1xf32>
      %408 = vector.shape_cast %407 : vector<1xf32> to vector<1x1x1xf32>
      %409 = vector.extract %408[0, 0, 0] : f32 from vector<1x1x1xf32>
      %c1_230 = arith.constant 1 : index
      %c0_231 = arith.constant 0 : index
      %c0_232 = arith.constant 0 : index
      %410 = vector.load %arg8[%c1_230, %c0_231, %c0_232] : memref<4x2x128xf32, #tpu.memory_space<vmem>>, vector<1x2x128xf32>
      %411 = vector.shape_cast %410 : vector<1x2x128xf32> to vector<2x128xf32>
      %412 = vector.shape_cast %411 : vector<2x128xf32> to vector<1x2x128xf32>
      %cst_233 = arith.constant dense<0.000000e+00> : vector<1xf32>
      %413 = vector.multi_reduction <add>, %412, %cst_233 [1, 2] : vector<1x2x128xf32> to vector<1xf32>
      %414 = vector.shape_cast %413 : vector<1xf32> to vector<1x1x1xf32>
      %415 = vector.extract %414[0, 0, 0] : f32 from vector<1x1x1xf32>
      %c1_234 = arith.constant 1 : index
      %c0_235 = arith.constant 0 : index
      %c0_236 = arith.constant 0 : index
      %416 = vector.load %arg9[%c1_234, %c0_235, %c0_236] : memref<4x2x128xf32, #tpu.memory_space<vmem>>, vector<1x2x128xf32>
      %417 = vector.shape_cast %416 : vector<1x2x128xf32> to vector<2x128xf32>
      %418 = vector.shape_cast %417 : vector<2x128xf32> to vector<1x2x128xf32>
      %cst_237 = arith.constant dense<0.000000e+00> : vector<1xf32>
      %419 = vector.multi_reduction <add>, %418, %cst_237 [1, 2] : vector<1x2x128xf32> to vector<1xf32>
      %420 = vector.shape_cast %419 : vector<1xf32> to vector<1x1x1xf32>
      %421 = vector.extract %420[0, 0, 0] : f32 from vector<1x1x1xf32>
      %422 = arith.addf %403, %409 : f32
      %cst_238 = arith.constant 2.000000e+00 : f32
      %423 = arith.mulf %cst_238, %397 : f32
      %cst_239 = arith.constant 9.99999974E-6 : f32
      %424 = arith.addf %423, %cst_239 : f32
      %cst_240 = arith.constant 9.99999974E-6 : f32
      %425 = arith.addf %422, %cst_240 : f32
      %cst_241 = arith.constant 1.000000e-07 : f32
      %426 = arith.maximumf %425, %cst_241 : f32
      %427 = arith.divf %424, %426 : f32
      %cst_242 = arith.constant 0.000000e+00 : f32
      %428 = arith.cmpf ogt, %409, %cst_242 : f32
      %429 = arith.extui %428 : i1 to i32
      %430 = arith.sitofp %429 : i32 to f32
      %cst_243 = arith.constant 1.000000e+00 : f32
      %431 = arith.subf %cst_243, %427 : f32
      %432 = arith.mulf %431, %430 : f32
      %433 = arith.addf %388, %432 : f32
      %cst_244 = arith.constant 9.99999997E-7 : f32
      %434 = arith.maximumf %415, %cst_244 : f32
      %435 = arith.divf %421, %434 : f32
      %436 = arith.addf %391, %435 : f32
      %c2_245 = arith.constant 2 : index
      %c0_246 = arith.constant 0 : index
      %c0_247 = arith.constant 0 : index
      %437 = vector.load %arg5[%c2_245, %c0_246, %c0_247] : memref<4x2x128xf32, #tpu.memory_space<vmem>>, vector<1x2x128xf32>
      %438 = vector.shape_cast %437 : vector<1x2x128xf32> to vector<2x128xf32>
      %439 = vector.shape_cast %438 : vector<2x128xf32> to vector<1x2x128xf32>
      %cst_248 = arith.constant dense<0.000000e+00> : vector<1xf32>
      %440 = vector.multi_reduction <add>, %439, %cst_248 [1, 2] : vector<1x2x128xf32> to vector<1xf32>
      %441 = vector.shape_cast %440 : vector<1xf32> to vector<1x1x1xf32>
      %442 = vector.extract %441[0, 0, 0] : f32 from vector<1x1x1xf32>
      %c2_249 = arith.constant 2 : index
      %c0_250 = arith.constant 0 : index
      %c0_251 = arith.constant 0 : index
      %443 = vector.load %arg6[%c2_249, %c0_250, %c0_251] : memref<4x2x128xf32, #tpu.memory_space<vmem>>, vector<1x2x128xf32>
      %444 = vector.shape_cast %443 : vector<1x2x128xf32> to vector<2x128xf32>
      %445 = vector.shape_cast %444 : vector<2x128xf32> to vector<1x2x128xf32>
      %cst_252 = arith.constant dense<0.000000e+00> : vector<1xf32>
      %446 = vector.multi_reduction <add>, %445, %cst_252 [1, 2] : vector<1x2x128xf32> to vector<1xf32>
      %447 = vector.shape_cast %446 : vector<1xf32> to vector<1x1x1xf32>
      %448 = vector.extract %447[0, 0, 0] : f32 from vector<1x1x1xf32>
      %c2_253 = arith.constant 2 : index
      %c0_254 = arith.constant 0 : index
      %c0_255 = arith.constant 0 : index
      %449 = vector.load %arg7[%c2_253, %c0_254, %c0_255] : memref<4x2x128xf32, #tpu.memory_space<vmem>>, vector<1x2x128xf32>
      %450 = vector.shape_cast %449 : vector<1x2x128xf32> to vector<2x128xf32>
      %451 = vector.shape_cast %450 : vector<2x128xf32> to vector<1x2x128xf32>
      %cst_256 = arith.constant dense<0.000000e+00> : vector<1xf32>
      %452 = vector.multi_reduction <add>, %451, %cst_256 [1, 2] : vector<1x2x128xf32> to vector<1xf32>
      %453 = vector.shape_cast %452 : vector<1xf32> to vector<1x1x1xf32>
      %454 = vector.extract %453[0, 0, 0] : f32 from vector<1x1x1xf32>
      %c2_257 = arith.constant 2 : index
      %c0_258 = arith.constant 0 : index
      %c0_259 = arith.constant 0 : index
      %455 = vector.load %arg8[%c2_257, %c0_258, %c0_259] : memref<4x2x128xf32, #tpu.memory_space<vmem>>, vector<1x2x128xf32>
      %456 = vector.shape_cast %455 : vector<1x2x128xf32> to vector<2x128xf32>
      %457 = vector.shape_cast %456 : vector<2x128xf32> to vector<1x2x128xf32>
      %cst_260 = arith.constant dense<0.000000e+00> : vector<1xf32>
      %458 = vector.multi_reduction <add>, %457, %cst_260 [1, 2] : vector<1x2x128xf32> to vector<1xf32>
      %459 = vector.shape_cast %458 : vector<1xf32> to vector<1x1x1xf32>
      %460 = vector.extract %459[0, 0, 0] : f32 from vector<1x1x1xf32>
      %c2_261 = arith.constant 2 : index
      %c0_262 = arith.constant 0 : index
      %c0_263 = arith.constant 0 : index
      %461 = vector.load %arg9[%c2_261, %c0_262, %c0_263] : memref<4x2x128xf32, #tpu.memory_space<vmem>>, vector<1x2x128xf32>
      %462 = vector.shape_cast %461 : vector<1x2x128xf32> to vector<2x128xf32>
      %463 = vector.shape_cast %462 : vector<2x128xf32> to vector<1x2x128xf32>
      %cst_264 = arith.constant dense<0.000000e+00> : vector<1xf32>
      %464 = vector.multi_reduction <add>, %463, %cst_264 [1, 2] : vector<1x2x128xf32> to vector<1xf32>
      %465 = vector.shape_cast %464 : vector<1xf32> to vector<1x1x1xf32>
      %466 = vector.extract %465[0, 0, 0] : f32 from vector<1x1x1xf32>
      %467 = arith.addf %448, %454 : f32
      %cst_265 = arith.constant 2.000000e+00 : f32
      %468 = arith.mulf %cst_265, %442 : f32
      %cst_266 = arith.constant 9.99999974E-6 : f32
      %469 = arith.addf %468, %cst_266 : f32
      %cst_267 = arith.constant 9.99999974E-6 : f32
      %470 = arith.addf %467, %cst_267 : f32
      %cst_268 = arith.constant 1.000000e-07 : f32
      %471 = arith.maximumf %470, %cst_268 : f32
      %472 = arith.divf %469, %471 : f32
      %cst_269 = arith.constant 0.000000e+00 : f32
      %473 = arith.cmpf ogt, %454, %cst_269 : f32
      %474 = arith.extui %473 : i1 to i32
      %475 = arith.sitofp %474 : i32 to f32
      %cst_270 = arith.constant 1.000000e+00 : f32
      %476 = arith.subf %cst_270, %472 : f32
      %477 = arith.mulf %476, %475 : f32
      %478 = arith.addf %433, %477 : f32
      %cst_271 = arith.constant 9.99999997E-7 : f32
      %479 = arith.maximumf %460, %cst_271 : f32
      %480 = arith.divf %466, %479 : f32
      %481 = arith.addf %436, %480 : f32
      %c3_272 = arith.constant 3 : index
      %c0_273 = arith.constant 0 : index
      %c0_274 = arith.constant 0 : index
      %482 = vector.load %arg5[%c3_272, %c0_273, %c0_274] : memref<4x2x128xf32, #tpu.memory_space<vmem>>, vector<1x2x128xf32>
      %483 = vector.shape_cast %482 : vector<1x2x128xf32> to vector<2x128xf32>
      %484 = vector.shape_cast %483 : vector<2x128xf32> to vector<1x2x128xf32>
      %cst_275 = arith.constant dense<0.000000e+00> : vector<1xf32>
      %485 = vector.multi_reduction <add>, %484, %cst_275 [1, 2] : vector<1x2x128xf32> to vector<1xf32>
      %486 = vector.shape_cast %485 : vector<1xf32> to vector<1x1x1xf32>
      %487 = vector.extract %486[0, 0, 0] : f32 from vector<1x1x1xf32>
      %c3_276 = arith.constant 3 : index
      %c0_277 = arith.constant 0 : index
      %c0_278 = arith.constant 0 : index
      %488 = vector.load %arg6[%c3_276, %c0_277, %c0_278] : memref<4x2x128xf32, #tpu.memory_space<vmem>>, vector<1x2x128xf32>
      %489 = vector.shape_cast %488 : vector<1x2x128xf32> to vector<2x128xf32>
      %490 = vector.shape_cast %489 : vector<2x128xf32> to vector<1x2x128xf32>
      %cst_279 = arith.constant dense<0.000000e+00> : vector<1xf32>
      %491 = vector.multi_reduction <add>, %490, %cst_279 [1, 2] : vector<1x2x128xf32> to vector<1xf32>
      %492 = vector.shape_cast %491 : vector<1xf32> to vector<1x1x1xf32>
      %493 = vector.extract %492[0, 0, 0] : f32 from vector<1x1x1xf32>
      %c3_280 = arith.constant 3 : index
      %c0_281 = arith.constant 0 : index
      %c0_282 = arith.constant 0 : index
      %494 = vector.load %arg7[%c3_280, %c0_281, %c0_282] : memref<4x2x128xf32, #tpu.memory_space<vmem>>, vector<1x2x128xf32>
      %495 = vector.shape_cast %494 : vector<1x2x128xf32> to vector<2x128xf32>
      %496 = vector.shape_cast %495 : vector<2x128xf32> to vector<1x2x128xf32>
      %cst_283 = arith.constant dense<0.000000e+00> : vector<1xf32>
      %497 = vector.multi_reduction <add>, %496, %cst_283 [1, 2] : vector<1x2x128xf32> to vector<1xf32>
      %498 = vector.shape_cast %497 : vector<1xf32> to vector<1x1x1xf32>
      %499 = vector.extract %498[0, 0, 0] : f32 from vector<1x1x1xf32>
      %c3_284 = arith.constant 3 : index
      %c0_285 = arith.constant 0 : index
      %c0_286 = arith.constant 0 : index
      %500 = vector.load %arg8[%c3_284, %c0_285, %c0_286] : memref<4x2x128xf32, #tpu.memory_space<vmem>>, vector<1x2x128xf32>
      %501 = vector.shape_cast %500 : vector<1x2x128xf32> to vector<2x128xf32>
      %502 = vector.shape_cast %501 : vector<2x128xf32> to vector<1x2x128xf32>
      %cst_287 = arith.constant dense<0.000000e+00> : vector<1xf32>
      %503 = vector.multi_reduction <add>, %502, %cst_287 [1, 2] : vector<1x2x128xf32> to vector<1xf32>
      %504 = vector.shape_cast %503 : vector<1xf32> to vector<1x1x1xf32>
      %505 = vector.extract %504[0, 0, 0] : f32 from vector<1x1x1xf32>
      %c3_288 = arith.constant 3 : index
      %c0_289 = arith.constant 0 : index
      %c0_290 = arith.constant 0 : index
      %506 = vector.load %arg9[%c3_288, %c0_289, %c0_290] : memref<4x2x128xf32, #tpu.memory_space<vmem>>, vector<1x2x128xf32>
      %507 = vector.shape_cast %506 : vector<1x2x128xf32> to vector<2x128xf32>
      %508 = vector.shape_cast %507 : vector<2x128xf32> to vector<1x2x128xf32>
      %cst_291 = arith.constant dense<0.000000e+00> : vector<1xf32>
      %509 = vector.multi_reduction <add>, %508, %cst_291 [1, 2] : vector<1x2x128xf32> to vector<1xf32>
      %510 = vector.shape_cast %509 : vector<1xf32> to vector<1x1x1xf32>
      %511 = vector.extract %510[0, 0, 0] : f32 from vector<1x1x1xf32>
      %512 = arith.addf %493, %499 : f32
      %cst_292 = arith.constant 2.000000e+00 : f32
      %513 = arith.mulf %cst_292, %487 : f32
      %cst_293 = arith.constant 9.99999974E-6 : f32
      %514 = arith.addf %513, %cst_293 : f32
      %cst_294 = arith.constant 9.99999974E-6 : f32
      %515 = arith.addf %512, %cst_294 : f32
      %cst_295 = arith.constant 1.000000e-07 : f32
      %516 = arith.maximumf %515, %cst_295 : f32
      %517 = arith.divf %514, %516 : f32
      %cst_296 = arith.constant 0.000000e+00 : f32
      %518 = arith.cmpf ogt, %499, %cst_296 : f32
      %519 = arith.extui %518 : i1 to i32
      %520 = arith.sitofp %519 : i32 to f32
      %cst_297 = arith.constant 1.000000e+00 : f32
      %521 = arith.subf %cst_297, %517 : f32
      %522 = arith.mulf %521, %520 : f32
      %523 = arith.addf %478, %522 : f32
      %cst_298 = arith.constant 9.99999997E-7 : f32
      %524 = arith.maximumf %505, %cst_298 : f32
      %525 = arith.divf %511, %524 : f32
      %526 = arith.addf %481, %525 : f32
      %cst_299 = arith.constant 4.000000e+00 : f32
      %527 = arith.divf %523, %cst_299 : f32
      %cst_300 = arith.constant 5.120000e+02 : f32
      %528 = arith.divf %526, %cst_300 : f32
      %529 = arith.addf %527, %528 : f32
      %c0_301 = arith.constant 0 : index
      %c0_302 = arith.constant 0 : index
      %530 = memref.load %arg4[%c0_301, %c0_302] : memref<1x1xf32, #tpu.memory_space<smem>>
      memref.store %529, %arg4[%c0_301, %c0_302] : memref<1x1xf32, #tpu.memory_space<smem>>
    } else {
    }
    return
  }
  func.func @transform_0(%arg0: i32, %arg1: i32) -> (i32, i32, i32, i32) {
    %c0_i32 = arith.constant 0 : i32
    %c0_i32_0 = arith.constant 0 : i32
    %c0_i32_1 = arith.constant 0 : i32
    return %arg0, %c0_i32, %arg1, %c0_i32_0 : i32, i32, i32, i32
  }
  func.func @transform_1(%arg0: i32, %arg1: i32) -> (i32, i32, i32) {
    %c0_i32 = arith.constant 0 : i32
    %c0_i32_0 = arith.constant 0 : i32
    return %arg0, %arg1, %c0_i32 : i32, i32, i32
  }
  func.func @transform_2(%arg0: i32, %arg1: i32) -> (i32, i32) {
    %c0_i32 = arith.constant 0 : i32
    %c0_i32_0 = arith.constant 0 : i32
    %c0_i32_1 = arith.constant 0 : i32
    return %c0_i32, %c0_i32_0 : i32, i32
  }
}

</mosaic_0001>

<llo_original>
// kernel: tpu_custom_call.1
$region0: #{tpu_custom_call.1}
  #allocation0 [shape = 'u32[]', space=smem, size = 0x4, offset = 0x4, fixed_abs, tag = 'smem constant byte address 0x4 - core index']
  #allocation1 [shape = 'u32[144,128]{1,0:T(1,128)}', space=vmem, size = 0x12000, scoped, tag = 'internal scratch']
  #allocation2 [shape = 'f32[4,2,128]{2,1,0:T(2,128)}', space=vmem, size = 0x1000, scoped, tag = 'scratch operand']
  #allocation3 [shape = 'f32[4,2,128]{2,1,0:T(2,128)}', space=vmem, size = 0x1000, scoped, tag = 'scratch operand']
  #allocation4 [shape = 'f32[4,2,128]{2,1,0:T(2,128)}', space=vmem, size = 0x1000, scoped, tag = 'scratch operand']
  #allocation5 [shape = 'f32[4,2,128]{2,1,0:T(2,128)}', space=vmem, size = 0x1000, scoped, tag = 'scratch operand']
  #allocation6 [shape = 'f32[4,2,128]{2,1,0:T(2,128)}', space=vmem, size = 0x1000, scoped, tag = 'scratch operand']
  %s0 = inlined_call_operand.hbm [shape: f32[2,4,2,128], index: 0, kind: input, shape index: {}]
  %s1 = inlined_call_operand.hbm [shape: s32[2,2,128], index: 1, kind: input, shape index: {}]
  %s2 = inlined_call_operand.hbm [shape: f32[1,1], index: 2, kind: output, shape index: {}]
  %s3 = sld [smem:[#allocation0]]
  $region57: #{tpu_custom_call.1} parent=0
    _
  %s5 = ssub.s32 1, %s3
  %s6 = scalar_select 0, %s5, %s3
  $region1: #{tpu_custom_call.1} parent=0
    #allocation7 [shape = 'u8[8192]{0}', space=vmem, size = 0x2000, scoped, tag = 'input window, operand 0']
    #allocation8 [shape = 's32[2]{0}', space=sflag, size = 0x8, scoped, tag = 'scoped memory for tpu_custom_call.1']
    #allocation9 [shape = 's32[2]{0}', space=sflag, size = 0x8, scoped, tag = 'scoped memory for tpu_custom_call.1']
    #allocation10 [shape = 'u8[2048]{0}', space=vmem, size = 0x800, scoped, tag = 'input window, operand 1']
    #allocation11 [shape = 's32[2]{0}', space=sflag, size = 0x8, scoped, tag = 'scoped memory for tpu_custom_call.1']
    #allocation12 [shape = 'u8[512]{0}', space=smem, size = 0x200, scoped, tag = 'output window, operand 0, single buffered']
    %7 = vsyncpa [#allocation8], 0
    %s8 = scalar_lea.sflag [#allocation8], 1
    %9 = vsyncpa %s8, 0
    %10 = vsyncpa [#allocation11], 0
    %s11 = scalar_lea.sflag [#allocation11], 1
    %12 = vsyncpa %s11, 0
    %13 = vsyncpa [#allocation9], 0
    loop: start=0, step=1, limit=4
    $region2: #{tpu_custom_call.1} parent=1 // loop_pre_header
      _
    $region3: #{tpu_custom_call.1} parent=1 // loop_header
      %s15 = sphi 0, %s19
      %p16 = scmp.ge.s32.totalorder %s15, 4
      %s22 = sphi 0, %s34
      %s23 = sphi 0, %s30
      %s24 = sphi 0, %s22
      %s25 = sphi 0, %s23
      %s26 = sphi 0, %s24
      %s27 = sphi 0, %s25
      %s39 = sphi 0, %s41
      %s42 = sphi 0, %s39
      %s43 = sphi 0, %s42
      %s59 = sphi 0, %s43
      %s67 = sphi 0, %s69
      %s70 = sphi 0, %s67
      %s71 = sphi 0, %s70
      %s87 = sphi 0, %s71
      %s91 = sphi 0, %s91
      %s93 = sphi 0, %s91
      %s94 = sphi 0, %s93
      %s108 = sphi 0, %s94
    $region4: #{tpu_custom_call.1} parent=1 // loop_header_branch
      %18 = sbr.rel (%p16) target = $region8
    $region5: #{tpu_custom_call.1} parent=1 // loop_body
      %s20 = ssub.s32 %s15, 1
      %s21 = ssub.s32 %s15, 2
      %s28 = sadd.s32 1, %s23
      %p29 = scmp.ge.s32.totalorder %s28, 1
      %s30 = scalar_select %p29, 0, %s28
      %s31 = sadd.s32 1, %s22
      %s32 = scalar_select %p29, %s31, %s22
      %p33 = scmp.ge.s32.totalorder %s32, 2
      %s34 = scalar_select %p33, 0, %s32
      %s35 = ssub.s32 %s22, %s34
      %s36 = ssub.s32 %s23, %s30
      %s37 = sor.u32 %s35, %s36
      %p38 = scmp.eq.s32.totalorder %s37, 0
      %s40 = sadd.s32 %s39, 1
      %s41 = scalar_select %p38, %s39, %s40
      %p44 = pneg %p38
      %p45 = scmp.eq.s32.totalorder %s15, 1
      %p46 = por %p44, %p45
      %p47 = scmp.ne.s32.totalorder %s39, %s42
      %p48 = scmp.eq.s32.totalorder %s15, 0
      %p49 = por %p47, %p48
      %p50 = scmp.ne.s32.totalorder %s39, %s42
      %p51 = scmp.eq.s32.totalorder %s20, 1
      %p52 = por %p50, %p51
      %p53 = scmp.ne.s32.totalorder %s42, %s43
      %p54 = scmp.eq.s32.totalorder %s20, 0
      %p55 = por %p53, %p54
      %p56 = scmp.ne.s32.totalorder %s42, %s43
      %p57 = scmp.eq.s32.totalorder %s21, 1
      %p58 = por %p56, %p57
      %p60 = scmp.ne.s32.totalorder %s43, %s59
      %p61 = scmp.eq.s32.totalorder %s21, 0
      %p62 = por %p60, %p61
      %s63 = ssub.s32 %s22, %s34
      %s64 = ssub.s32 %s23, %s30
      %s65 = sor.u32 %s63, %s64
      %p66 = scmp.eq.s32.totalorder %s65, 0
      %s68 = sadd.s32 %s67, 1
      %s69 = scalar_select %p66, %s67, %s68
      %p72 = pneg %p66
      %p73 = scmp.eq.s32.totalorder %s15, 1
      %p74 = por %p72, %p73
      %p75 = scmp.ne.s32.totalorder %s67, %s70
      %p76 = scmp.eq.s32.totalorder %s15, 0
      %p77 = por %p75, %p76
      %p78 = scmp.ne.s32.totalorder %s67, %s70
      %p79 = scmp.eq.s32.totalorder %s20, 1
      %p80 = por %p78, %p79
      %p81 = scmp.ne.s32.totalorder %s70, %s71
      %p82 = scmp.eq.s32.totalorder %s20, 0
      %p83 = por %p81, %p82
      %p84 = scmp.ne.s32.totalorder %s70, %s71
      %p85 = scmp.eq.s32.totalorder %s21, 1
      %p86 = por %p84, %p85
      %p88 = scmp.ne.s32.totalorder %s71, %s87
      %p89 = scmp.eq.s32.totalorder %s21, 0
      %p90 = por %p88, %p89
      %s92 = sadd.s32 %s91, 1
      %p95 = scmp.eq.s32.totalorder %s15, 1
      %p96 = scmp.ne.s32.totalorder %s91, %s93
      %p97 = scmp.eq.s32.totalorder %s15, 0
      %p98 = por %p96, %p97
      %p99 = scmp.ne.s32.totalorder %s91, %s93
      %p100 = scmp.eq.s32.totalorder %s20, 1
      %p101 = por %p99, %p100
      %p102 = scmp.ne.s32.totalorder %s93, %s94
      %p103 = scmp.eq.s32.totalorder %s20, 0
      %p104 = por %p102, %p103
      %p105 = scmp.ne.s32.totalorder %s93, %s94
      %p106 = scmp.eq.s32.totalorder %s21, 1
      %p107 = por %p105, %p106
      %p109 = scmp.ne.s32.totalorder %s94, %s108
      %p110 = scmp.eq.s32.totalorder %s21, 0
      %p111 = por %p109, %p110
      %p112 = scmp.le.s32.totalorder 1, %s15
      %p113 = scmp.lt.s32.totalorder %s15, 3
      %p114 = pnand %p112, %p113
      %p115 = pneg %p114
      // Predicated region
      $region9: #{tpu_custom_call.1} parent=5 // pred_check
        _
      $region10: #{tpu_custom_call.1} parent=5 // pred_check_branch
        %117 = sbr.rel (%p114) target = $region12
      $region11: #{tpu_custom_call.1} parent=5 // pred_region
        %s118 = ssub.s32 %s15, 1
      $region12: #{tpu_custom_call.1} parent=5 // pred_fallthru
        _
      %p119 = scmp.lt.s32.totalorder %s15, 2
      // Predicated region
      $region13: #{tpu_custom_call.1} parent=5 // pred_check
        %p120 = pneg %p119
      $region14: #{tpu_custom_call.1} parent=5 // pred_check_branch
        %122 = sbr.rel (%p120) target = $region16
      $region15: #{tpu_custom_call.1} parent=5 // pred_region
        // Predicated region
        $region17: #{tpu_custom_call.1} parent=15 // pred_check
          %p123 = pneg %p49
        $region18: #{tpu_custom_call.1} parent=15 // pred_check_branch
          %125 = sbr.rel (%p123) target = $region20
        $region19: #{tpu_custom_call.1} parent=15 // pred_region
          %s126 = sand.u32 %s39, 1
          %s127 = scalar_lea.sflag [#allocation8], %s126
          %s128 = sand.u32 %s39, 1
          %s129 = smul.addr %s128, 8
          %s130 = scalar_lea.vmem [#allocation7], %s129
          %s132 = ssub.s32 128, 128
          %133 = vsyncadd %s127, %s132
          %s134 = smul.addr %s22, 4
          %s135 = sadd.s32 %s23, %s134
          %s136 = smul.addr %s135, 32
          %s137 = scalar_lea.hbm %s0, %s136
          %s138 = sshll.u32 %s130, 4
          %s139 = int_to_ptr.vmem [resolvable:$true] %s138
          %144 = dma.hbm_to_vmem [thread:$0]  %s137, 128, %s139, %s127, 32, 32, 2
        $region20: #{tpu_custom_call.1} parent=15 // pred_fallthru
          _
        // Predicated region
        $region21: #{tpu_custom_call.1} parent=15 // pred_check
          %p145 = pneg %p77
        $region22: #{tpu_custom_call.1} parent=15 // pred_check_branch
          %147 = sbr.rel (%p145) target = $region24
        $region23: #{tpu_custom_call.1} parent=15 // pred_region
          %s148 = sand.u32 %s67, 1
          %s149 = scalar_lea.sflag [#allocation11], %s148
          %s150 = sand.u32 %s67, 1
          %s151 = smul.addr %s150, 2
          %s152 = scalar_lea.vmem [#allocation10], %s151
          %s154 = ssub.s32 32, 32
          %155 = vsyncadd %s149, %s154
          %s156 = sadd.s32 %s23, %s22
          %s157 = smul.addr %s156, 32
          %s158 = scalar_lea.hbm %s1, %s157
          %s160 = sshll.u32 %s152, 4
          %s161 = int_to_ptr.vmem [resolvable:$true] %s160
          %163 = dma.hbm_to_vmem [thread:$0]  %s158, 32, %s161, %s149
        $region24: #{tpu_custom_call.1} parent=15 // pred_fallthru
          _
      $region16: #{tpu_custom_call.1} parent=5 // pred_fallthru
        _
      %p164 = scmp.le.s32.totalorder 1, %s15
      %p165 = scmp.lt.s32.totalorder %s15, 3
      %p166 = pnand %p164, %p165
      %p167 = pneg %p166
      // Predicated region
      $region25: #{tpu_custom_call.1} parent=5 // pred_check
        _
      $region26: #{tpu_custom_call.1} parent=5 // pred_check_branch
        %169 = sbr.rel (%p166) target = $region28
      $region27: #{tpu_custom_call.1} parent=5 // pred_region
        %s170 = ssub.s32 %s15, 1
        %s171 = sand.u32 %s42, 1
        %s172 = scalar_lea.sflag [#allocation8], %s171
        %s173 = sand.u32 %s42, 1
        %s174 = smul.addr %s173, 8
        %s175 = scalar_lea.vmem [#allocation7], %s174
        // Predicated region
        $region29: #{tpu_custom_call.1} parent=27 // pred_check
          %p176 = pneg %p55
        $region30: #{tpu_custom_call.1} parent=27 // pred_check_branch
          %178 = sbr.rel (%p176) target = $region32
        $region31: #{tpu_custom_call.1} parent=27 // pred_region
          %179 = dma.done %s172, 128
        $region32: #{tpu_custom_call.1} parent=27 // pred_fallthru
          _
        %s180 = sand.u32 %s70, 1
        %s181 = scalar_lea.sflag [#allocation11], %s180
        %s182 = sand.u32 %s70, 1
        %s183 = smul.addr %s182, 2
        %s184 = scalar_lea.vmem [#allocation10], %s183
        // Predicated region
        $region33: #{tpu_custom_call.1} parent=27 // pred_check
          %p185 = pneg %p83
        $region34: #{tpu_custom_call.1} parent=27 // pred_check_branch
          %187 = sbr.rel (%p185) target = $region36
        $region35: #{tpu_custom_call.1} parent=27 // pred_region
          %188 = dma.done %s181, 32
        $region36: #{tpu_custom_call.1} parent=27 // pred_fallthru
          _
        %s189 = sand.u32 %s42, 1
        %s190 = scalar_lea.sflag [#allocation8], %s189
        %s191 = sand.u32 %s42, 1
        %s192 = smul.addr %s191, 8
        %s193 = scalar_lea.vmem [#allocation7], %s192
        %p194 = pneg %p55
        %p195 = pneg %p52
        %s196 = sand.u32 %s70, 1
        %s197 = scalar_lea.sflag [#allocation11], %s196
        %s198 = sand.u32 %s70, 1
        %s199 = smul.addr %s198, 2
        %s200 = scalar_lea.vmem [#allocation10], %s199
        %p201 = pneg %p83
        %p202 = pneg %p80
        %p203 = pneg %p104
        %p204 = pneg %p101
        %p205 = scmp.eq.s32.totalorder %s24, 0
        %p206 = scmp.eq.s32.totalorder %s25, 0
        %p207 = pnand %p205, %p206
        %p208 = pneg %p207
        %p209 = scmp.eq.s32.totalorder %s24, 1
        %p210 = pnand %p209, %p206
        %p211 = pneg %p210
        // Predicated region
        $region37: #{tpu_custom_call.1} parent=27 // pred_check
          _
        $region38: #{tpu_custom_call.1} parent=27 // pred_check_branch
          %213 = sbr.rel (%p207) target = $region40
        $region39: #{tpu_custom_call.1} parent=27 // pred_region
          %214 = vst [vmem:[#allocation2] sm:$0x3] 0.0
          %215 = vst [vmem:[#allocation2 + $0x2] sm:$0x3] 0.0
          %216 = vst [vmem:[#allocation2 + $0x4] sm:$0x3] 0.0
          %217 = vst [vmem:[#allocation2 + $0x6] sm:$0x3] 0.0
          %218 = vst [vmem:[#allocation3] sm:$0x3] 0.0
          %219 = vst [vmem:[#allocation3 + $0x2] sm:$0x3] 0.0
          %220 = vst [vmem:[#allocation3 + $0x4] sm:$0x3] 0.0
          %221 = vst [vmem:[#allocation3 + $0x6] sm:$0x3] 0.0
          %222 = vst [vmem:[#allocation4] sm:$0x3] 0.0
          %223 = vst [vmem:[#allocation4 + $0x2] sm:$0x3] 0.0
          %224 = vst [vmem:[#allocation4 + $0x4] sm:$0x3] 0.0
          %225 = vst [vmem:[#allocation4 + $0x6] sm:$0x3] 0.0
          %226 = vst [vmem:[#allocation5] sm:$0x3] 0.0
          %227 = vst [vmem:[#allocation5 + $0x2] sm:$0x3] 0.0
          %228 = vst [vmem:[#allocation5 + $0x4] sm:$0x3] 0.0
          %229 = vst [vmem:[#allocation5 + $0x6] sm:$0x3] 0.0
          %230 = vst [vmem:[#allocation6] sm:$0x3] 0.0
          %231 = vst [vmem:[#allocation6 + $0x2] sm:$0x3] 0.0
          %232 = vst [vmem:[#allocation6 + $0x4] sm:$0x3] 0.0
          %233 = vst [vmem:[#allocation6 + $0x6] sm:$0x3] 0.0
        $region40: #{tpu_custom_call.1} parent=27 // pred_fallthru
          _
        %v234 = vld [vmem:[%s184] sm:$0x3]
        %vm235 = vcmp.ge.s32.totalorder %v234, 0
        %v236 = vsel %vm235, 1, 0
        %v237 = vcvt.s32.f32 %v236
        %v238 = vld [vmem:[%s175] sm:$0x3]
        %s239 = scalar_lea.vmem %s175, 2 [#allocation7]
        %v240 = vld [vmem:[%s239] sm:$0x3]
        %s241 = scalar_lea.vmem %s175, 4 [#allocation7]
        %v242 = vld [vmem:[%s241] sm:$0x3]
        %s243 = scalar_lea.vmem %s175, 6 [#allocation7]
        %v244 = vld [vmem:[%s243] sm:$0x3]
        %v245 = vmax.f32 %v238, %v240
        %v246 = vmax.f32 %v245, %v242
        %v247 = vmax.f32 %v246, %v244
        %v248 = vsub.f32 %v238, %v247
        %v249 = vmul.f32 %v248, 1.442695
        %v250 = vpow.pop %v249
        %v251 = vsub.f32 %v240, %v247
        %v252 = vmul.f32 %v251, 1.442695
        %v253 = vpow.pop %v252
        %v254 = vsub.f32 %v242, %v247
        %v255 = vmul.f32 %v254, 1.442695
        %v256 = vpow.pop %v255
        %v257 = vsub.f32 %v244, %v247
        %v258 = vmul.f32 %v257, 1.442695
        %v259 = vpow.pop %v258
        %v260 = vadd.f32 %v250, %v253
        %v261 = vadd.f32 %v260, %v256
        %v262 = vadd.f32 %v261, %v259
        %v263 = vrcp.pop %v262
        %vm264 = vcmp.eq.s32.totalorder %v234, 0
        %v265 = vsel %vm264, 1, 0
        %v266 = vcvt.s32.f32 %v265
        %v267 = vmul.f32 %v250, %v263
        %v268 = vld [vmem:[#allocation2] sm:$0x3]
        %v269 = vmul.f32 %v267, %v266
        %v270 = vadd.f32 %v268, %v269
        %271 = vst [vmem:[#allocation2] sm:$0x3] %v270
        %v272 = vld [vmem:[#allocation3] sm:$0x3]
        %v273 = vmul.f32 %v267, %v237
        %v274 = vadd.f32 %v272, %v273
        %275 = vst [vmem:[#allocation3] sm:$0x3] %v274
        %v276 = vld [vmem:[#allocation4] sm:$0x3]
        %v277 = vadd.f32 %v276, %v266
        %278 = vst [vmem:[#allocation4] sm:$0x3] %v277
        %v279 = vand.u32 2147483647, %v238
        %v280 = vsub.f32 0.0, %v279
        %v281 = vmul.f32 %v280, 1.442695
        %v282 = vpow.pop %v281
        %v283 = vmax.f32 %v238, 0.0
        %v284 = vmul.f32 %v238, %v266
        %v285 = vsub.f32 %v283, %v284
        %v286 = vadd.f32 %v282, 1.0
        %v287 = vlog2.pop %v286
        %v288 = vmul.f32 %v287, 0.6931472
        %v289 = vadd.f32 %v285, %v288
        %v290 = vmul.f32 %v266, 2.0
        %v291 = vsub.f32 %v290, 1.0
        %v292 = vmul.f32 %v238, %v291
        %vm293 = vcmp.ge.f32.partialorder %v292, 0.0
        %v294 = vsel %vm293, 1.0, %v282
        %v295 = vrcp.pop %v286
        %v296 = vmul.f32 %v294, %v295
        %v297 = vsub.f32 1.0, %v296
        %v298 = vmax.f32 %v297, 0.0
        %v299 = vmul.f32 %v298, %v298
        %v300 = vmul.f32 %v299, %v299
        %v301 = vrsqrt.pop %v298
        %v302 = vmul.f32 %v298, %v301
        %vm303 = vcmp.eq.f32.partialorder %v298, inf
        %v304 = vsel %vm303, %v298, %v302
        %vm305 = vcmp.eq.f32.partialorder %v298, 0.0
        %v306 = vand.u32 %v298, 2147483648
        %v307 = vsel %vm305, %v306, %v304
        %v308 = vmul.f32 %v300, %v307
        %v309 = vmul.f32 %v266, -0.8
        %v310 = vadd.f32 %v309, 0.9
        %v311 = vld [vmem:[#allocation5] sm:$0x3]
        %v312 = vmul.f32 %v308, %v237
        %v313 = vadd.f32 %v311, %v312
        %314 = vst [vmem:[#allocation5] sm:$0x3] %v313
        %v315 = vld [vmem:[#allocation6] sm:$0x3]
        %v316 = vmul.f32 %v308, %v289
        %v317 = vmul.f32 %v316, %v310
        %v318 = vmul.f32 %v317, %v237
        %v319 = vadd.f32 %v315, %v318
        %320 = vst [vmem:[#allocation6] sm:$0x3] %v319
        %vm321 = vcmp.eq.s32.totalorder %v234, 1
        %v322 = vsel %vm321, 1, 0
        %v323 = vcvt.s32.f32 %v322
        %v324 = vmul.f32 %v253, %v263
        %s325 = scalar_lea.vmem [#allocation2], 2
        %v326 = vld [vmem:[%s325] sm:$0x3]
        %v327 = vmul.f32 %v324, %v323
        %v328 = vadd.f32 %v326, %v327
        %329 = vst [vmem:[%s325] sm:$0x3] %v328
        %s330 = scalar_lea.vmem [#allocation3], 2
        %v331 = vld [vmem:[%s330] sm:$0x3]
        %v332 = vmul.f32 %v324, %v237
        %v333 = vadd.f32 %v331, %v332
        %334 = vst [vmem:[%s330] sm:$0x3] %v333
        %s335 = scalar_lea.vmem [#allocation4], 2
        %v336 = vld [vmem:[%s335] sm:$0x3]
        %v337 = vadd.f32 %v336, %v323
        %338 = vst [vmem:[%s335] sm:$0x3] %v337
        %v339 = vand.u32 2147483647, %v240
        %v340 = vsub.f32 0.0, %v339
        %v341 = vmul.f32 %v340, 1.442695
        %v342 = vpow.pop %v341
        %v343 = vmax.f32 %v240, 0.0
        %v344 = vmul.f32 %v240, %v323
        %v345 = vsub.f32 %v343, %v344
        %v346 = vadd.f32 %v342, 1.0
        %v347 = vlog2.pop %v346
        %v348 = vmul.f32 %v347, 0.6931472
        %v349 = vadd.f32 %v345, %v348
        %v350 = vmul.f32 %v323, 2.0
        %v351 = vsub.f32 %v350, 1.0
        %v352 = vmul.f32 %v240, %v351
        %vm353 = vcmp.ge.f32.partialorder %v352, 0.0
        %v354 = vsel %vm353, 1.0, %v342
        %v355 = vrcp.pop %v346
        %v356 = vmul.f32 %v354, %v355
        %v357 = vsub.f32 1.0, %v356
        %v358 = vmax.f32 %v357, 0.0
        %v359 = vmul.f32 %v358, %v358
        %v360 = vmul.f32 %v359, %v359
        %v361 = vrsqrt.pop %v358
        %v362 = vmul.f32 %v358, %v361
        %vm363 = vcmp.eq.f32.partialorder %v358, inf
        %v364 = vsel %vm363, %v358, %v362
        %vm365 = vcmp.eq.f32.partialorder %v358, 0.0
        %v366 = vand.u32 %v358, 2147483648
        %v367 = vsel %vm365, %v366, %v364
        %v368 = vmul.f32 %v360, %v367
        %v369 = vmul.f32 %v323, -0.8
        %v370 = vadd.f32 %v369, 0.9
        %s371 = scalar_lea.vmem [#allocation5], 2
        %v372 = vld [vmem:[%s371] sm:$0x3]
        %v373 = vmul.f32 %v368, %v237
        %v374 = vadd.f32 %v372, %v373
        %375 = vst [vmem:[%s371] sm:$0x3] %v374
        %s376 = scalar_lea.vmem [#allocation6], 2
        %v377 = vld [vmem:[%s376] sm:$0x3]
        %v378 = vmul.f32 %v368, %v349
        %v379 = vmul.f32 %v378, %v370
        %v380 = vmul.f32 %v379, %v237
        %v381 = vadd.f32 %v377, %v380
        %382 = vst [vmem:[%s376] sm:$0x3] %v381
        %vm383 = vcmp.eq.s32.totalorder %v234, 2
        %v384 = vsel %vm383, 1, 0
        %v385 = vcvt.s32.f32 %v384
        %v386 = vmul.f32 %v256, %v263
        %s387 = scalar_lea.vmem [#allocation2], 4
        %v388 = vld [vmem:[%s387] sm:$0x3]
        %v389 = vmul.f32 %v386, %v385
        %v390 = vadd.f32 %v388, %v389
        %391 = vst [vmem:[%s387] sm:$0x3] %v390
        %s392 = scalar_lea.vmem [#allocation3], 4
        %v393 = vld [vmem:[%s392] sm:$0x3]
        %v394 = vmul.f32 %v386, %v237
        %v395 = vadd.f32 %v393, %v394
        %396 = vst [vmem:[%s392] sm:$0x3] %v395
        %s397 = scalar_lea.vmem [#allocation4], 4
        %v398 = vld [vmem:[%s397] sm:$0x3]
        %v399 = vadd.f32 %v398, %v385
        %400 = vst [vmem:[%s397] sm:$0x3] %v399
        %v401 = vand.u32 2147483647, %v242
        %v402 = vsub.f32 0.0, %v401
        %v403 = vmul.f32 %v402, 1.442695
        %v404 = vpow.pop %v403
        %v405 = vmax.f32 %v242, 0.0
        %v406 = vmul.f32 %v242, %v385
        %v407 = vsub.f32 %v405, %v406
        %v408 = vadd.f32 %v404, 1.0
        %v409 = vlog2.pop %v408
        %v410 = vmul.f32 %v409, 0.6931472
        %v411 = vadd.f32 %v407, %v410
        %v412 = vmul.f32 %v385, 2.0
        %v413 = vsub.f32 %v412, 1.0
        %v414 = vmul.f32 %v242, %v413
        %vm415 = vcmp.ge.f32.partialorder %v414, 0.0
        %v416 = vsel %vm415, 1.0, %v404
        %v417 = vrcp.pop %v408
        %v418 = vmul.f32 %v416, %v417
        %v419 = vsub.f32 1.0, %v418
        %v420 = vmax.f32 %v419, 0.0
        %v421 = vmul.f32 %v420, %v420
        %v422 = vmul.f32 %v421, %v421
        %v423 = vrsqrt.pop %v420
        %v424 = vmul.f32 %v420, %v423
        %vm425 = vcmp.eq.f32.partialorder %v420, inf
        %v426 = vsel %vm425, %v420, %v424
        %vm427 = vcmp.eq.f32.partialorder %v420, 0.0
        %v428 = vand.u32 %v420, 2147483648
        %v429 = vsel %vm427, %v428, %v426
        %v430 = vmul.f32 %v422, %v429
        %v431 = vmul.f32 %v385, -0.8
        %v432 = vadd.f32 %v431, 0.9
        %s433 = scalar_lea.vmem [#allocation5], 4
        %v434 = vld [vmem:[%s433] sm:$0x3]
        %v435 = vmul.f32 %v430, %v237
        %v436 = vadd.f32 %v434, %v435
        %437 = vst [vmem:[%s433] sm:$0x3] %v436
        %s438 = scalar_lea.vmem [#allocation6], 4
        %v439 = vld [vmem:[%s438] sm:$0x3]
        %v440 = vmul.f32 %v430, %v411
        %v441 = vmul.f32 %v440, %v432
        %v442 = vmul.f32 %v441, %v237
        %v443 = vadd.f32 %v439, %v442
        %444 = vst [vmem:[%s438] sm:$0x3] %v443
        %vm445 = vcmp.eq.s32.totalorder %v234, 3
        %v446 = vsel %vm445, 1, 0
        %v447 = vcvt.s32.f32 %v446
        %v448 = vmul.f32 %v259, %v263
        %s449 = scalar_lea.vmem [#allocation2], 6
        %v450 = vld [vmem:[%s449] sm:$0x3]
        %v451 = vmul.f32 %v448, %v447
        %v452 = vadd.f32 %v450, %v451
        %453 = vst [vmem:[%s449] sm:$0x3] %v452
        %s454 = scalar_lea.vmem [#allocation3], 6
        %v455 = vld [vmem:[%s454] sm:$0x3]
        %v456 = vmul.f32 %v448, %v237
        %v457 = vadd.f32 %v455, %v456
        %458 = vst [vmem:[%s454] sm:$0x3] %v457
        %s459 = scalar_lea.vmem [#allocation4], 6
        %v460 = vld [vmem:[%s459] sm:$0x3]
        %v461 = vadd.f32 %v460, %v447
        %462 = vst [vmem:[%s459] sm:$0x3] %v461
        %v463 = vand.u32 2147483647, %v244
        %v464 = vsub.f32 0.0, %v463
        %v465 = vmul.f32 %v464, 1.442695
        %v466 = vpow.pop %v465
        %v467 = vmax.f32 %v244, 0.0
        %v468 = vmul.f32 %v244, %v447
        %v469 = vsub.f32 %v467, %v468
        %v470 = vadd.f32 %v466, 1.0
        %v471 = vlog2.pop %v470
        %v472 = vmul.f32 %v471, 0.6931472
        %v473 = vadd.f32 %v469, %v472
        %v474 = vmul.f32 %v447, 2.0
        %v475 = vsub.f32 %v474, 1.0
        %v476 = vmul.f32 %v244, %v475
        %vm477 = vcmp.ge.f32.partialorder %v476, 0.0
        %v478 = vsel %vm477, 1.0, %v466
        %v479 = vrcp.pop %v470
        %v480 = vmul.f32 %v478, %v479
        %v481 = vsub.f32 1.0, %v480
        %v482 = vmax.f32 %v481, 0.0
        %v483 = vmul.f32 %v482, %v482
        %v484 = vmul.f32 %v483, %v483
        %v485 = vrsqrt.pop %v482
        %v486 = vmul.f32 %v482, %v485
        %vm487 = vcmp.eq.f32.partialorder %v482, inf
        %v488 = vsel %vm487, %v482, %v486
        %vm489 = vcmp.eq.f32.partialorder %v482, 0.0
        %v490 = vand.u32 %v482, 2147483648
        %v491 = vsel %vm489, %v490, %v488
        %v492 = vmul.f32 %v484, %v491
        %v493 = vmul.f32 %v447, -0.8
        %v494 = vadd.f32 %v493, 0.9
        %s495 = scalar_lea.vmem [#allocation5], 6
        %v496 = vld [vmem:[%s495] sm:$0x3]
        %v497 = vmul.f32 %v492, %v237
        %v498 = vadd.f32 %v496, %v497
        %499 = vst [vmem:[%s495] sm:$0x3] %v498
        %s500 = scalar_lea.vmem [#allocation6], 6
        %v501 = vld [vmem:[%s500] sm:$0x3]
        %v502 = vmul.f32 %v492, %v473
        %v503 = vmul.f32 %v502, %v494
        %v504 = vmul.f32 %v503, %v237
        %v505 = vadd.f32 %v501, %v504
        %506 = vst [vmem:[%s500] sm:$0x3] %v505
        // Predicated region
        $region41: #{tpu_custom_call.1} parent=27 // pred_check
          _
        $region42: #{tpu_custom_call.1} parent=27 // pred_check_branch
          %508 = sbr.rel (%p210) target = $region44
        $region43: #{tpu_custom_call.1} parent=27 // pred_region
          %v509 = vld [vmem:[#allocation2] sm:$0x3]
          %vm510 = vcmask 1041408
          %v511 = vsel %vm510, %v509, 0.0
          %512 = vadd.xlane.f32.xlu0 %v511
          %v513 = vpop.xlane.xlu0 %512
          %v514 = vrot.slane %v513, 4
          %v515 = vadd.f32 %v513, %v514
          %v516 = vrot.slane %v515, 2
          %v517 = vadd.f32 %v515, %v516
          %v518 = vrot.slane %v517, 1
          %v519 = vadd.f32 %v517, %v518
          %s520 = vtos %v519
          %v521 = vld [vmem:[#allocation3] sm:$0x3]
          %v522 = vsel %vm510, %v521, 0.0
          %523 = vadd.xlane.f32.xlu0 %v522
          %v524 = vpop.xlane.xlu0 %523
          %v525 = vrot.slane %v524, 4
          %v526 = vadd.f32 %v524, %v525
          %v527 = vrot.slane %v526, 2
          %v528 = vadd.f32 %v526, %v527
          %v529 = vrot.slane %v528, 1
          %v530 = vadd.f32 %v528, %v529
          %s531 = vtos %v530
          %v532 = vld [vmem:[#allocation4] sm:$0x3]
          %v533 = vsel %vm510, %v532, 0.0
          %534 = vadd.xlane.f32.xlu0 %v533
          %v535 = vpop.xlane.xlu0 %534
          %v536 = vrot.slane %v535, 4
          %v537 = vadd.f32 %v535, %v536
          %v538 = vrot.slane %v537, 2
          %v539 = vadd.f32 %v537, %v538
          %v540 = vrot.slane %v539, 1
          %v541 = vadd.f32 %v539, %v540
          %s542 = vtos %v541
          %v543 = vld [vmem:[#allocation5] sm:$0x3]
          %v544 = vsel %vm510, %v543, 0.0
          %545 = vadd.xlane.f32.xlu0 %v544
          %v546 = vpop.xlane.xlu0 %545
          %v547 = vrot.slane %v546, 4
          %v548 = vadd.f32 %v546, %v547
          %v549 = vrot.slane %v548, 2
          %v550 = vadd.f32 %v548, %v549
          %v551 = vrot.slane %v550, 1
          %v552 = vadd.f32 %v550, %v551
          %s553 = vtos %v552
          %v554 = vld [vmem:[#allocation6] sm:$0x3]
          %v555 = vsel %vm510, %v554, 0.0
          %556 = vadd.xlane.f32.xlu0 %v555
          %v557 = vpop.xlane.xlu0 %556
          %v558 = vrot.slane %v557, 4
          %v559 = vadd.f32 %v557, %v558
          %v560 = vrot.slane %v559, 2
          %v561 = vadd.f32 %v559, %v560
          %v562 = vrot.slane %v561, 1
          %v563 = vadd.f32 %v561, %v562
          %s564 = vtos %v563
          %s565 = sadd.f32 %s531, %s542
          %s566 = smul.f32 %s520, 2.0
          %s567 = sadd.f32 %s566, 1e-05
          %s568 = sadd.f32 %s565, 1e-05
          %s569 = smax.f32 %s568, 1e-07
          %v570 = vstv %s569
          %v571 = vrcp.pop %v570
          %s572 = vtos %v571
          %s573 = smul.f32 %s567, %s572
          %p574 = scmp.gt.f32.partialorder %s542, 0.0
          %s575 = scalar_select %p574, 1, 0
          %s576 = scvt.s32.f32 %s575
          %s577 = ssub.f32 1.0, %s573
          %s578 = smul.f32 %s577, %s576
          %s579 = sadd.f32 %s578, 0.0
          %s580 = smax.f32 %s553, 1e-06
          %v581 = vstv %s580
          %v582 = vrcp.pop %v581
          %s583 = vtos %v582
          %s584 = smul.f32 %s564, %s583
          %s585 = sadd.f32 %s584, 0.0
          %v586 = vld [vmem:[%s325] sm:$0x3]
          %v587 = vsel %vm510, %v586, 0.0
          %588 = vadd.xlane.f32.xlu0 %v587
          %v589 = vpop.xlane.xlu0 %588
          %v590 = vrot.slane %v589, 4
          %v591 = vadd.f32 %v589, %v590
          %v592 = vrot.slane %v591, 2
          %v593 = vadd.f32 %v591, %v592
          %v594 = vrot.slane %v593, 1
          %v595 = vadd.f32 %v593, %v594
          %s596 = vtos %v595
          %v597 = vld [vmem:[%s330] sm:$0x3]
          %v598 = vsel %vm510, %v597, 0.0
          %599 = vadd.xlane.f32.xlu0 %v598
          %v600 = vpop.xlane.xlu0 %599
          %v601 = vrot.slane %v600, 4
          %v602 = vadd.f32 %v600, %v601
          %v603 = vrot.slane %v602, 2
          %v604 = vadd.f32 %v602, %v603
          %v605 = vrot.slane %v604, 1
          %v606 = vadd.f32 %v604, %v605
          %s607 = vtos %v606
          %v608 = vld [vmem:[%s335] sm:$0x3]
          %v609 = vsel %vm510, %v608, 0.0
          %610 = vadd.xlane.f32.xlu0 %v609
          %v611 = vpop.xlane.xlu0 %610
          %v612 = vrot.slane %v611, 4
          %v613 = vadd.f32 %v611, %v612
          %v614 = vrot.slane %v613, 2
          %v615 = vadd.f32 %v613, %v614
          %v616 = vrot.slane %v615, 1
          %v617 = vadd.f32 %v615, %v616
          %s618 = vtos %v617
          %v619 = vld [vmem:[%s371] sm:$0x3]
          %v620 = vsel %vm510, %v619, 0.0
          %621 = vadd.xlane.f32.xlu0 %v620
          %v622 = vpop.xlane.xlu0 %621
          %v623 = vrot.slane %v622, 4
          %v624 = vadd.f32 %v622, %v623
          %v625 = vrot.slane %v624, 2
          %v626 = vadd.f32 %v624, %v625
          %v627 = vrot.slane %v626, 1
          %v628 = vadd.f32 %v626, %v627
          %s629 = vtos %v628
          %v630 = vld [vmem:[%s376] sm:$0x3]
          %v631 = vsel %vm510, %v630, 0.0
          %632 = vadd.xlane.f32.xlu0 %v631
          %v633 = vpop.xlane.xlu0 %632
          %v634 = vrot.slane %v633, 4
          %v635 = vadd.f32 %v633, %v634
          %v636 = vrot.slane %v635, 2
          %v637 = vadd.f32 %v635, %v636
          %v638 = vrot.slane %v637, 1
          %v639 = vadd.f32 %v637, %v638
          %s640 = vtos %v639
          %s641 = sadd.f32 %s607, %s618
          %s642 = smul.f32 %s596, 2.0
          %s643 = sadd.f32 %s642, 1e-05
          %s644 = sadd.f32 %s641, 1e-05
          %s645 = smax.f32 %s644, 1e-07
          %v646 = vstv %s645
          %v647 = vrcp.pop %v646
          %s648 = vtos %v647
          %s649 = smul.f32 %s643, %s648
          %p650 = scmp.gt.f32.partialorder %s618, 0.0
          %s651 = scalar_select %p650, 1, 0
          %s652 = scvt.s32.f32 %s651
          %s653 = ssub.f32 1.0, %s649
          %s654 = smul.f32 %s653, %s652
          %s655 = sadd.f32 %s579, %s654
          %s656 = smax.f32 %s629, 1e-06
          %v657 = vstv %s656
          %v658 = vrcp.pop %v657
          %s659 = vtos %v658
          %s660 = smul.f32 %s640, %s659
          %s661 = sadd.f32 %s585, %s660
          %v662 = vld [vmem:[%s387] sm:$0x3]
          %v663 = vsel %vm510, %v662, 0.0
          %664 = vadd.xlane.f32.xlu0 %v663
          %v665 = vpop.xlane.xlu0 %664
          %v666 = vrot.slane %v665, 4
          %v667 = vadd.f32 %v665, %v666
          %v668 = vrot.slane %v667, 2
          %v669 = vadd.f32 %v667, %v668
          %v670 = vrot.slane %v669, 1
          %v671 = vadd.f32 %v669, %v670
          %s672 = vtos %v671
          %v673 = vld [vmem:[%s392] sm:$0x3]
          %v674 = vsel %vm510, %v673, 0.0
          %675 = vadd.xlane.f32.xlu0 %v674
          %v676 = vpop.xlane.xlu0 %675
          %v677 = vrot.slane %v676, 4
          %v678 = vadd.f32 %v676, %v677
          %v679 = vrot.slane %v678, 2
          %v680 = vadd.f32 %v678, %v679
          %v681 = vrot.slane %v680, 1
          %v682 = vadd.f32 %v680, %v681
          %s683 = vtos %v682
          %v684 = vld [vmem:[%s397] sm:$0x3]
          %v685 = vsel %vm510, %v684, 0.0
          %686 = vadd.xlane.f32.xlu0 %v685
          %v687 = vpop.xlane.xlu0 %686
          %v688 = vrot.slane %v687, 4
          %v689 = vadd.f32 %v687, %v688
          %v690 = vrot.slane %v689, 2
          %v691 = vadd.f32 %v689, %v690
          %v692 = vrot.slane %v691, 1
          %v693 = vadd.f32 %v691, %v692
          %s694 = vtos %v693
          %v695 = vld [vmem:[%s433] sm:$0x3]
          %v696 = vsel %vm510, %v695, 0.0
          %697 = vadd.xlane.f32.xlu0 %v696
          %v698 = vpop.xlane.xlu0 %697
          %v699 = vrot.slane %v698, 4
          %v700 = vadd.f32 %v698, %v699
          %v701 = vrot.slane %v700, 2
          %v702 = vadd.f32 %v700, %v701
          %v703 = vrot.slane %v702, 1
          %v704 = vadd.f32 %v702, %v703
          %s705 = vtos %v704
          %v706 = vld [vmem:[%s438] sm:$0x3]
          %v707 = vsel %vm510, %v706, 0.0
          %708 = vadd.xlane.f32.xlu0 %v707
          %v709 = vpop.xlane.xlu0 %708
          %v710 = vrot.slane %v709, 4
          %v711 = vadd.f32 %v709, %v710
          %v712 = vrot.slane %v711, 2
          %v713 = vadd.f32 %v711, %v712
          %v714 = vrot.slane %v713, 1
          %v715 = vadd.f32 %v713, %v714
          %s716 = vtos %v715
          %s717 = sadd.f32 %s683, %s694
          %s718 = smul.f32 %s672, 2.0
          %s719 = sadd.f32 %s718, 1e-05
          %s720 = sadd.f32 %s717, 1e-05
          %s721 = smax.f32 %s720, 1e-07
          %v722 = vstv %s721
          %v723 = vrcp.pop %v722
          %s724 = vtos %v723
          %s725 = smul.f32 %s719, %s724
          %p726 = scmp.gt.f32.partialorder %s694, 0.0
          %s727 = scalar_select %p726, 1, 0
          %s728 = scvt.s32.f32 %s727
          %s729 = ssub.f32 1.0, %s725
          %s730 = smul.f32 %s729, %s728
          %s731 = sadd.f32 %s655, %s730
          %s732 = smax.f32 %s705, 1e-06
          %v733 = vstv %s732
          %v734 = vrcp.pop %v733
          %s735 = vtos %v734
          %s736 = smul.f32 %s716, %s735
          %s737 = sadd.f32 %s661, %s736
          %v738 = vld [vmem:[%s449] sm:$0x3]
          %v739 = vsel %vm510, %v738, 0.0
          %740 = vadd.xlane.f32.xlu0 %v739
          %v741 = vpop.xlane.xlu0 %740
          %v742 = vrot.slane %v741, 4
          %v743 = vadd.f32 %v741, %v742
          %v744 = vrot.slane %v743, 2
          %v745 = vadd.f32 %v743, %v744
          %v746 = vrot.slane %v745, 1
          %v747 = vadd.f32 %v745, %v746
          %s748 = vtos %v747
          %v749 = vld [vmem:[%s454] sm:$0x3]
          %v750 = vsel %vm510, %v749, 0.0
          %751 = vadd.xlane.f32.xlu0 %v750
          %v752 = vpop.xlane.xlu0 %751
          %v753 = vrot.slane %v752, 4
          %v754 = vadd.f32 %v752, %v753
          %v755 = vrot.slane %v754, 2
          %v756 = vadd.f32 %v754, %v755
          %v757 = vrot.slane %v756, 1
          %v758 = vadd.f32 %v756, %v757
          %s759 = vtos %v758
          %v760 = vld [vmem:[%s459] sm:$0x3]
          %v761 = vsel %vm510, %v760, 0.0
          %762 = vadd.xlane.f32.xlu0 %v761
          %v763 = vpop.xlane.xlu0 %762
          %v764 = vrot.slane %v763, 4
          %v765 = vadd.f32 %v763, %v764
          %v766 = vrot.slane %v765, 2
          %v767 = vadd.f32 %v765, %v766
          %v768 = vrot.slane %v767, 1
          %v769 = vadd.f32 %v767, %v768
          %s770 = vtos %v769
          %v771 = vld [vmem:[%s495] sm:$0x3]
          %v772 = vsel %vm510, %v771, 0.0
          %773 = vadd.xlane.f32.xlu0 %v772
          %v774 = vpop.xlane.xlu0 %773
          %v775 = vrot.slane %v774, 4
          %v776 = vadd.f32 %v774, %v775
          %v777 = vrot.slane %v776, 2
          %v778 = vadd.f32 %v776, %v777
          %v779 = vrot.slane %v778, 1
          %v780 = vadd.f32 %v778, %v779
          %s781 = vtos %v780
          %v782 = vld [vmem:[%s500] sm:$0x3]
          %v783 = vsel %vm510, %v782, 0.0
          %784 = vadd.xlane.f32.xlu0 %v783
          %v785 = vpop.xlane.xlu0 %784
          %v786 = vrot.slane %v785, 4
          %v787 = vadd.f32 %v785, %v786
          %v788 = vrot.slane %v787, 2
          %v789 = vadd.f32 %v787, %v788
          %v790 = vrot.slane %v789, 1
          %v791 = vadd.f32 %v789, %v790
          %s792 = vtos %v791
          %s793 = sadd.f32 %s759, %s770
          %s794 = smul.f32 %s748, 2.0
          %s795 = sadd.f32 %s794, 1e-05
          %s796 = sadd.f32 %s793, 1e-05
          %s797 = smax.f32 %s796, 1e-07
          %v798 = vstv %s797
          %v799 = vrcp.pop %v798
          %s800 = vtos %v799
          %s801 = smul.f32 %s795, %s800
          %p802 = scmp.gt.f32.partialorder %s770, 0.0
          %s803 = scalar_select %p802, 1, 0
          %s804 = scvt.s32.f32 %s803
          %s805 = ssub.f32 1.0, %s801
          %s806 = smul.f32 %s805, %s804
          %s807 = sadd.f32 %s731, %s806
          %s808 = smax.f32 %s781, 1e-06
          %v809 = vstv %s808
          %v810 = vrcp.pop %v809
          %s811 = vtos %v810
          %s812 = smul.f32 %s792, %s811
          %s813 = sadd.f32 %s737, %s812
          %v814 = vrcp.pop 4.0
          %s815 = vtos %v814
          %s816 = smul.f32 %s807, %s815
          %v817 = vrcp.pop 512.0
          %s818 = vtos %v817
          %s819 = smul.f32 %s813, %s818
          %s820 = sadd.f32 %s816, %s819
          %s821 = scalar_lea.smem [#allocation12], 0
          %822 = sst [smem:[%s821]] %s820
        $region44: #{tpu_custom_call.1} parent=27 // pred_fallthru
          _
        // Predicated region
        $region45: #{tpu_custom_call.1} parent=27 // pred_check
          %p823 = pneg %p101
        $region46: #{tpu_custom_call.1} parent=27 // pred_check_branch
          %825 = sbr.rel (%p823) target = $region48
        $region47: #{tpu_custom_call.1} parent=27 // pred_region
          %s827 = ssub.s32 16, 16
          %828 = vsyncadd [#allocation9], %s827
          %831 = dma.smem_to_hbm [#allocation12], 16, %s2, [#allocation9]
        $region48: #{tpu_custom_call.1} parent=27 // pred_fallthru
          _
        // Predicated region
        $region49: #{tpu_custom_call.1} parent=27 // pred_check
          %p832 = pneg %p101
        $region50: #{tpu_custom_call.1} parent=27 // pred_check_branch
          %834 = sbr.rel (%p832) target = $region52
        $region51: #{tpu_custom_call.1} parent=27 // pred_region
          %835 = dma.done [#allocation9], 16
        $region52: #{tpu_custom_call.1} parent=27 // pred_fallthru
          _
        %836 = sfence
      $region28: #{tpu_custom_call.1} parent=5 // pred_fallthru
        _
      %p837 = scmp.le.s32.totalorder 2, %s15
      // Predicated region
      $region53: #{tpu_custom_call.1} parent=5 // pred_check
        %p838 = pneg %p837
      $region54: #{tpu_custom_call.1} parent=5 // pred_check_branch
        %840 = sbr.rel (%p838) target = $region56
      $region55: #{tpu_custom_call.1} parent=5 // pred_region
        %s841 = ssub.s32 %s15, 2
      $region56: #{tpu_custom_call.1} parent=5 // pred_fallthru
        _
    $region6: #{tpu_custom_call.1} parent=1 // loop_footer
      %s19 = sadd.s32 1, %s15
    $region7: #{tpu_custom_call.1} parent=1 // loop_footer_branch
      %14 = sbr.rel target = $region3
    $region8: #{tpu_custom_call.1} parent=1 // loop_exit
      _
    %842 = vsyncpa [#allocation8], 1
    %s843 = scalar_lea.sflag [#allocation8], 1
    %844 = vsyncpa %s843, 1
    %845 = vsyncpa [#allocation11], 1
    %s846 = scalar_lea.sflag [#allocation11], 1
    %847 = vsyncpa %s846, 1
    %848 = vsyncpa [#allocation9], 1
    %s849 = scalar_lea.sflag [#allocation9], 1
    %850 = vsyncpa %s849, 1

</llo_original>
